<compile_context>
chip_gen: v6e
topology: v6e:2x2x1
jax: 0.10.0
libtpu: 0.0.40
codegen_flags: <defaults>
</compile_context>

<pallas_src>
import functools

import jax
import jax.numpy as jnp
from jax.experimental import pallas as pl
from jax.experimental.pallas import tpu as pltpu

# ---------------------------------------------------------------------------
# Model hyper-parameters (small, consistent with the module's forward)
# ---------------------------------------------------------------------------
IMG_C, IMG_H, IMG_W = 3, 32, 32     # RGB images (NCHW like PyTorch)
PATCH = 16                          # stand-in backbone: 16x16 stride-16 conv
CFEAT = 2048                        # resnet.fc.in_features for ResNet-152
EMB = 32                            # embedding_size
E_PAD = 128                         # lane-dense padded embedding width
C_TILE = 512                        # CFEAT tile (grid/reduction chunk)
BN_EPS = 1e-5                       # nn.BatchNorm1d default eps


# ---------------------------------------------------------------------------
# Fused Pallas kernel
# ---------------------------------------------------------------------------
def _fused_kernel(pool_ref, patches_ref, wp_ref, wfc_ref, prm_ref,
                  o_ref, acc_ref, *, eps):
    """One CFEAT chunk per grid step:
         feat   = relu(patches @ w_patch[:, chunk])        (P, C_TILE)
         pooled = pool_mat @ feat        (avg-pool over S)  (N, C_TILE)
         acc   += pooled @ w_fc[chunk, :]                   (N, E_PAD)
       Last step: z = acc + b ; BatchNorm1d(z) (batch stats) -> o_ref.
    """
    c = pl.program_id(0)

    @pl.when(c == 0)
    def _():
        acc_ref[...] = jnp.zeros_like(acc_ref)

    # Frozen backbone stand-in: bf16 MXU matmul + ReLU (f32 accumulation).
    feat = jnp.dot(patches_ref[...].astype(jnp.bfloat16), wp_ref[...],
                   preferred_element_type=jnp.float32)          # (P, C_TILE)
    feat = jnp.maximum(feat, 0.0)

    # Global average pooling expressed as a tiny matmul (rows carry 1/S).
    pooled = jnp.dot(pool_ref[...], feat,
                     preferred_element_type=jnp.float32)        # (N, C_TILE)

    # Partial Linear(2048, EMB) over this CFEAT chunk (lane-dense E_PAD slab).
    acc_ref[...] += jnp.dot(pooled, wfc_ref[...],
                            preferred_element_type=jnp.float32)  # (N, E_PAD)

    @pl.when(c == pl.num_programs(0) - 1)
    def _():
        b = prm_ref[0:1, :]       # linear bias
        gamma = prm_ref[1:2, :]   # BN weight
        beta = prm_ref[2:3, :]    # BN bias
        z = acc_ref[...] + b
        # BatchNorm1d in training mode: batch statistics, biased variance.
        mu = jnp.mean(z, axis=0, keepdims=True)
        var = jnp.mean((z - mu) ** 2, axis=0, keepdims=True)
        o_ref[...] = gamma * (z - mu) * jax.lax.rsqrt(var + eps) + beta


# ---------------------------------------------------------------------------
# Wrapper
# ---------------------------------------------------------------------------
def cnn_model_forward(images, params, eps=BN_EPS):
    """Forward pass mirroring CNNModel.forward.

    images: (N, 3, H, W) float32, NCHW like PyTorch.
    returns: (N, EMB) float32.
    """
    N, Cin, H, W = images.shape
    hp, wp = H // PATCH, W // PATCH
    S = hp * wp
    P = N * S
    K = Cin * PATCH * PATCH

    # im2col glue (pure layout plumbing): NCHW -> (N*S, Cin*PATCH*PATCH)
    patches = (
        images.reshape(N, Cin, hp, PATCH, wp, PATCH)
        .transpose(0, 2, 4, 1, 3, 5)
        .reshape(P, K)
    )
    # Pooling matrix: pool[n, n*S:(n+1)*S] = 1/S  -> avg-pool as matmul.
    pool = jnp.repeat(jnp.eye(N, dtype=jnp.float32), S, axis=1) / float(S)

    out = pl.pallas_call(
        functools.partial(_fused_kernel, eps=eps),
        out_shape=jax.ShapeDtypeStruct((N, E_PAD), jnp.float32),
        grid_spec=pltpu.PrefetchScalarGridSpec(
            num_scalar_prefetch=0,
            grid=(CFEAT // C_TILE,),
            in_specs=[
                pl.BlockSpec((N, P), lambda c: (0, 0)),          # pool matrix
                pl.BlockSpec((P, K), lambda c: (0, 0)),          # patches
                pl.BlockSpec((K, C_TILE), lambda c: (0, c)),     # w_patch chunk
                pl.BlockSpec((C_TILE, E_PAD), lambda c: (c, 0)), # w_fc chunk
                pl.BlockSpec((8, E_PAD), lambda c: (0, 0)),      # [b, gamma, beta]
            ],
            out_specs=pl.BlockSpec((N, E_PAD), lambda c: (0, 0)),
            scratch_shapes=[pltpu.VMEM((N, E_PAD), jnp.float32)],
        ),
        compiler_params=pltpu.CompilerParams(
            dimension_semantics=("arbitrary",),   # CFEAT axis is a reduction
            vmem_limit_bytes=16 << 20,
        ),
    )(pool, patches, params["w_patch"], params["w_fc_pad"], params["prm_pack"])

    return out[:, :EMB]


def init_params(key):
    k1, k2, k3 = jax.random.split(key, 3)
    kpatch = IMG_C * PATCH * PATCH

    # Frozen backbone stand-in conv (as matmul), deterministic, bf16 storage.
    w_patch = (jax.random.normal(k1, (kpatch, CFEAT), jnp.float32)
               * (1.0 / jnp.sqrt(kpatch))).astype(jnp.bfloat16)

    # Linear(2048, EMB): stored transposed (in_features, out_features),
    # zero-padded to a lane-dense E_PAD-wide slab.
    w_fc = jax.random.normal(k2, (CFEAT, EMB), jnp.float32) / jnp.sqrt(CFEAT)
    w_fc_pad = jnp.zeros((CFEAT, E_PAD), jnp.float32).at[:, :EMB].set(w_fc)

    # Pack linear bias + BatchNorm1d affine params into one (8, E_PAD) block.
    b_fc = jax.random.normal(k3, (EMB,), jnp.float32) * 0.01
    gamma = jnp.ones((EMB,), jnp.float32)     # BN weight (PyTorch default)
    beta = jnp.zeros((EMB,), jnp.float32)     # BN bias  (PyTorch default)
    prm_pack = jnp.zeros((8, E_PAD), jnp.float32)
    prm_pack = prm_pack.at[0, :EMB].set(b_fc)
    prm_pack = prm_pack.at[1, :EMB].set(gamma)
    prm_pack = prm_pack.at[2, :EMB].set(beta)

    return {"w_patch": w_patch, "w_fc_pad": w_fc_pad, "prm_pack": prm_pack}


if __name__ == "__main__":
    key = jax.random.PRNGKey(0)
    kx, kp = jax.random.split(key)
    images = jax.random.normal(kx, (2, IMG_C, IMG_H, IMG_W), jnp.float32)
    params = init_params(kp)

    out = jax.jit(cnn_model_forward)(images, params)
    out = jax.block_until_ready(out)

    assert out.shape == (2, EMB), out.shape
    assert out.dtype == jnp.float32
    assert bool(jnp.all(jnp.isfinite(out)))
    print("KERNEL_OK")
</pallas_src>

<mosaic_0001>
module attributes {stable_mosaic.version = 11 : i64} {
  func.func @_fused_kernel(%arg0: i32, %arg1: memref<2x8xf32, #tpu.memory_space<vmem>>, %arg2: memref<8x768xf32, #tpu.memory_space<vmem>>, %arg3: memref<768x512xbf16, #tpu.memory_space<vmem>>, %arg4: memref<512x128xf32, #tpu.memory_space<vmem>>, %arg5: memref<8x128xf32, #tpu.memory_space<vmem>>, %arg6: memref<2x128xf32, #tpu.memory_space<vmem>>, %arg7: memref<2x128xf32, #tpu.memory_space<vmem>>) attributes {dimension_semantics = [#tpu.dimension_semantics<arbitrary>], iteration_bounds = array<i64: 4>, scalar_prefetch = 0 : i64, scratch_operands = 1 : i64, tpu.core_type = #tpu.core_type<tc>, window_params = [{pipeline_mode = #tpu.pipeline_mode<synchronous>, transform_indices = @transform_0, window_bounds = array<i64: 2, 8>}, {pipeline_mode = #tpu.pipeline_mode<synchronous>, transform_indices = @transform_1, window_bounds = array<i64: 8, 768>}, {transform_indices = @transform_2, window_bounds = array<i64: 768, 512>}, {transform_indices = @transform_3, window_bounds = array<i64: 512, 128>}, {pipeline_mode = #tpu.pipeline_mode<synchronous>, transform_indices = @transform_4, window_bounds = array<i64: 8, 128>}, {pipeline_mode = #tpu.pipeline_mode<synchronous>, transform_indices = @transform_5, window_bounds = array<i64: 2, 128>}]} {
    %c0_i32 = arith.constant 0 : i32
    %0 = arith.cmpi eq, %arg0, %c0_i32 : i32
    %1 = arith.extui %0 : i1 to i32
    %c0_i32_0 = arith.constant 0 : i32
    %2 = arith.cmpi ne, %1, %c0_i32_0 : i32
    scf.if %2 {
      %cst_16 = arith.constant 0.000000e+00 : f32
      %19 = vector.broadcast %cst_16 : f32 to vector<2x128xf32>
      %c0_17 = arith.constant 0 : index
      %c0_18 = arith.constant 0 : index
      %20 = vector.load %arg7[%c0_17, %c0_18] : memref<2x128xf32, #tpu.memory_space<vmem>>, vector<2x128xf32>
      tpu.vector_store %arg7[%c0_17, %c0_18], %19 {strides = array<i32>} : memref<2x128xf32, #tpu.memory_space<vmem>>, vector<2x128xf32>,
    } else {
    }
    %c0 = arith.constant 0 : index
    %c0_1 = arith.constant 0 : index
    %3 = vector.load %arg2[%c0, %c0_1] : memref<8x768xf32, #tpu.memory_space<vmem>>, vector<8x768xf32>
    %4 = arith.truncf %3 : vector<8x768xf32> to vector<8x768xbf16>
    %c0_2 = arith.constant 0 : index
    %c0_3 = arith.constant 0 : index
    %5 = vector.load %arg3[%c0_2, %c0_3] : memref<768x512xbf16, #tpu.memory_space<vmem>>, vector<768x512xbf16>
    %cst = arith.constant dense<0.000000e+00> : vector<8x512xf32>
    %6 = tpu.matmul %4, %5, %cst {dimension_numbers = #tpu.dot_dimension_numbers<[1], [0], [0], [1], [0, 0, 1, 1], [], []>} : vector<8x768xbf16>, vector<768x512xbf16>, vector<8x512xf32> -> vector<8x512xf32>
    %cst_4 = arith.constant 0.000000e+00 : f32
    %7 = vector.broadcast %cst_4 : f32 to vector<8x512xf32>
    %8 = arith.maximumf %6, %7 : vector<8x512xf32>
    %c0_5 = arith.constant 0 : index
    %c0_6 = arith.constant 0 : index
    %9 = vector.load %arg1[%c0_5, %c0_6] : memref<2x8xf32, #tpu.memory_space<vmem>>, vector<2x8xf32>
    %cst_7 = arith.constant dense<0.000000e+00> : vector<2x512xf32>
    %10 = tpu.matmul %9, %8, %cst_7 {dimension_numbers = #tpu.dot_dimension_numbers<[1], [0], [0], [1], [0, 0, 1, 1], [], []>} : vector<2x8xf32>, vector<8x512xf32>, vector<2x512xf32> -> vector<2x512xf32>
    %c0_8 = arith.constant 0 : index
    %c0_9 = arith.constant 0 : index
    %11 = vector.load %arg7[%c0_8, %c0_9] : memref<2x128xf32, #tpu.memory_space<vmem>>, vector<2x128xf32>
    %c0_10 = arith.constant 0 : index
    %c0_11 = arith.constant 0 : index
    %12 = vector.load %arg4[%c0_10, %c0_11] : memref<512x128xf32, #tpu.memory_space<vmem>>, vector<512x128xf32>
    %cst_12 = arith.constant dense<0.000000e+00> : vector<2x128xf32>
    %13 = tpu.matmul %10, %12, %cst_12 {dimension_numbers = #tpu.dot_dimension_numbers<[1], [0], [0], [1], [0, 0, 1, 1], [], []>} : vector<2x512xf32>, vector<512x128xf32>, vector<2x128xf32> -> vector<2x128xf32>
    %14 = arith.addf %11, %13 : vector<2x128xf32>
    %c0_13 = arith.constant 0 : index
    %c0_14 = arith.constant 0 : index
    %15 = vector.load %arg7[%c0_13, %c0_14] : memref<2x128xf32, #tpu.memory_space<vmem>>, vector<2x128xf32>
    tpu.vector_store %arg7[%c0_13, %c0_14], %14 {strides = array<i32>} : memref<2x128xf32, #tpu.memory_space<vmem>>, vector<2x128xf32>,
    %c3_i32 = arith.constant 3 : i32
    %16 = arith.cmpi eq, %arg0, %c3_i32 : i32
    %17 = arith.extui %16 : i1 to i32
    %c0_i32_15 = arith.constant 0 : i32
    %18 = arith.cmpi ne, %17, %c0_i32_15 : i32
    scf.if %18 {
      %c0_16 = arith.constant 0 : index
      %c0_17 = arith.constant 0 : index
      %19 = vector.load %arg5[%c0_16, %c0_17] : memref<8x128xf32, #tpu.memory_space<vmem>>, vector<1x128xf32>
      %c1 = arith.constant 1 : index
      %c0_18 = arith.constant 0 : index
      %20 = vector.load %arg5[%c1, %c0_18] : memref<8x128xf32, #tpu.memory_space<vmem>>, vector<1x128xf32>
      %c2 = arith.constant 2 : index
      %c0_19 = arith.constant 0 : index
      %21 = vector.load %arg5[%c2, %c0_19] : memref<8x128xf32, #tpu.memory_space<vmem>>, vector<1x128xf32>
      %c0_20 = arith.constant 0 : index
      %c0_21 = arith.constant 0 : index
      %22 = vector.load %arg7[%c0_20, %c0_21] : memref<2x128xf32, #tpu.memory_space<vmem>>, vector<2x128xf32>
      %23 = vector.broadcast %19 : vector<1x128xf32> to vector<2x128xf32>
      %24 = arith.addf %22, %23 : vector<2x128xf32>
      %cst_22 = arith.constant dense<0.000000e+00> : vector<128xf32>
      %25 = vector.multi_reduction <add>, %24, %cst_22 [0] : vector<2x128xf32> to vector<128xf32>
      %26 = vector.shape_cast %25 : vector<128xf32> to vector<1x128xf32>
      %cst_23 = arith.constant 2.000000e+00 : f32
      %27 = vector.broadcast %cst_23 : f32 to vector<1x128xf32>
      %28 = arith.divf %26, %27 : vector<1x128xf32>
      %29 = vector.broadcast %28 : vector<1x128xf32> to vector<2x128xf32>
      %30 = arith.subf %24, %29 : vector<2x128xf32>
      %31 = arith.mulf %30, %30 : vector<2x128xf32>
      %cst_24 = arith.constant dense<0.000000e+00> : vector<128xf32>
      %32 = vector.multi_reduction <add>, %31, %cst_24 [0] : vector<2x128xf32> to vector<128xf32>
      %33 = vector.shape_cast %32 : vector<128xf32> to vector<1x128xf32>
      %cst_25 = arith.constant 2.000000e+00 : f32
      %34 = vector.broadcast %cst_25 : f32 to vector<1x128xf32>
      %35 = arith.divf %33, %34 : vector<1x128xf32>
      %36 = vector.broadcast %28 : vector<1x128xf32> to vector<2x128xf32>
      %37 = arith.subf %24, %36 : vector<2x128xf32>
      %38 = vector.broadcast %20 : vector<1x128xf32> to vector<2x128xf32>
      %39 = arith.mulf %38, %37 : vector<2x128xf32>
      %cst_26 = arith.constant 9.99999974E-6 : f32
      %40 = vector.broadcast %cst_26 : f32 to vector<1x128xf32>
      %41 = arith.addf %35, %40 : vector<1x128xf32>
      %42 = math.rsqrt %41 : vector<1x128xf32>
      %43 = vector.broadcast %42 : vector<1x128xf32> to vector<2x128xf32>
      %44 = arith.mulf %39, %43 : vector<2x128xf32>
      %45 = vector.broadcast %21 : vector<1x128xf32> to vector<2x128xf32>
      %46 = arith.addf %44, %45 : vector<2x128xf32>
      %c0_27 = arith.constant 0 : index
      %c0_28 = arith.constant 0 : index
      %47 = vector.load %arg6[%c0_27, %c0_28] : memref<2x128xf32, #tpu.memory_space<vmem>>, vector<2x128xf32>
      tpu.vector_store %arg6[%c0_27, %c0_28], %46 {strides = array<i32>} : memref<2x128xf32, #tpu.memory_space<vmem>>, vector<2x128xf32>,
    } else {
    }
    return
  }
  func.func @transform_0(%arg0: i32) -> (i32, i32) {
    %c0_i32 = arith.constant 0 : i32
    %c0_i32_0 = arith.constant 0 : i32
    %c0_i32_1 = arith.constant 0 : i32
    return %c0_i32, %c0_i32_0 : i32, i32
  }
  func.func @transform_1(%arg0: i32) -> (i32, i32) {
    %c0_i32 = arith.constant 0 : i32
    %c0_i32_0 = arith.constant 0 : i32
    %c0_i32_1 = arith.constant 0 : i32
    return %c0_i32, %c0_i32_0 : i32, i32
  }
  func.func @transform_2(%arg0: i32) -> (i32, i32) {
    %c0_i32 = arith.constant 0 : i32
    %c0_i32_0 = arith.constant 0 : i32
    return %c0_i32, %arg0 : i32, i32
  }
  func.func @transform_3(%arg0: i32) -> (i32, i32) {
    %c0_i32 = arith.constant 0 : i32
    %c0_i32_0 = arith.constant 0 : i32
    return %arg0, %c0_i32 : i32, i32
  }
  func.func @transform_4(%arg0: i32) -> (i32, i32) {
    %c0_i32 = arith.constant 0 : i32
    %c0_i32_0 = arith.constant 0 : i32
    %c0_i32_1 = arith.constant 0 : i32
    return %c0_i32, %c0_i32_0 : i32, i32
  }
  func.func @transform_5(%arg0: i32) -> (i32, i32) {
    %c0_i32 = arith.constant 0 : i32
    %c0_i32_0 = arith.constant 0 : i32
    %c0_i32_1 = arith.constant 0 : i32
    return %c0_i32, %c0_i32_0 : i32, i32
  }
}

</mosaic_0001>

<llo_original>
// kernel: cnn_model_forward.1
$region0: #{cnn_model_forward.1}
  #allocation0 [shape = 'u32[]', space=smem, size = 0x4, offset = 0x4, fixed_abs, tag = 'smem constant byte address 0x4 - core index']
  #allocation1 [shape = 'u32[144,128]{1,0:T(1,128)}', space=vmem, size = 0x12000, scoped, tag = 'internal scratch']
  #allocation2 [shape = 'f32[2,128]{1,0:T(2,128)}', space=vmem, size = 0x400, scoped, tag = 'scratch operand']
  %s0 = inlined_call_operand.vmem [shape: f32[2,8], index: 0, kind: input, shape index: {}]
  %s1 = inlined_call_operand.vmem [shape: f32[8,768], index: 1, kind: input, shape index: {}]
  %s2 = inlined_call_operand.hbm [shape: bf16[768,2048], index: 2, kind: input, shape index: {}]
  %s3 = inlined_call_operand.hbm [shape: f32[2048,128], index: 3, kind: input, shape index: {}]
  %s4 = inlined_call_operand.hbm [shape: f32[8,128], index: 4, kind: input, shape index: {}]
  %s5 = inlined_call_operand.hbm [shape: f32[2,128], index: 5, kind: output, shape index: {}]
  %s6 = sld [smem:[#allocation0]]
  $region73: #{cnn_model_forward.1} parent=0
    _
  %s8 = ssub.s32 1, %s6
  %s9 = scalar_select 0, %s8, %s6
  $region1: #{cnn_model_forward.1} parent=0
    #allocation3 [shape = 'u8[1572864]{0}', space=vmem, size = 0x180000, scoped, tag = 'input window, operand 2']
    #allocation4 [shape = 's32[2]{0}', space=sflag, size = 0x8, scoped, tag = 'scoped memory for cnn_model_forward.1']
    #allocation5 [shape = 's32[2]{0}', space=sflag, size = 0x8, scoped, tag = 'scoped memory for cnn_model_forward.1']
    #allocation6 [shape = 'u8[524288]{0}', space=vmem, size = 0x80000, scoped, tag = 'input window, operand 3']
    #allocation7 [shape = 's32[2]{0}', space=sflag, size = 0x8, scoped, tag = 'scoped memory for cnn_model_forward.1']
    #allocation8 [shape = 'u8[4096]{0}', space=vmem, size = 0x1000, scoped, tag = 'input window, operand 4, single buffered']
    #allocation9 [shape = 'u8[1024]{0}', space=vmem, size = 0x400, scoped, tag = 'output window, operand 0, single buffered']
    %10 = vsyncpa [#allocation4], 0
    %s11 = scalar_lea.sflag [#allocation4], 1
    %12 = vsyncpa %s11, 0
    %13 = vsyncpa [#allocation7], 0
    %s14 = scalar_lea.sflag [#allocation7], 1
    %15 = vsyncpa %s14, 0
    %16 = vsyncpa [#allocation5], 0
    loop: start=0, step=1, limit=6
    $region2: #{cnn_model_forward.1} parent=1 // loop_pre_header
      _
    $region3: #{cnn_model_forward.1} parent=1 // loop_header
      %s18 = sphi 0, %s22
      %p19 = scmp.ge.s32.totalorder %s18, 6
      %s26 = sphi 0, %s26
      %s28 = sphi 0, %s26
      %s29 = sphi 0, %s28
      %s43 = sphi 0, %s29
      %s47 = sphi 0, %s47
      %s49 = sphi 0, %s47
      %s50 = sphi 0, %s49
      %s64 = sphi 0, %s50
      %s70 = sphi 0, %s72
      %s73 = sphi 0, %s70
      %s74 = sphi 0, %s73
      %s90 = sphi 0, %s74
      %s96 = sphi 0, %s98
      %s99 = sphi 0, %s96
      %s100 = sphi 0, %s99
      %s116 = sphi 0, %s100
      %s120 = sphi 0, %s120
      %s122 = sphi 0, %s120
      %s123 = sphi 0, %s122
      %s137 = sphi 0, %s123
      %s141 = sphi 0, %s141
      %s143 = sphi 0, %s141
      %s144 = sphi 0, %s143
      %s158 = sphi 0, %s144
    $region4: #{cnn_model_forward.1} parent=1 // loop_header_branch
      %21 = sbr.rel (%p19) target = $region8
    $region5: #{cnn_model_forward.1} parent=1 // loop_body
      %s23 = ssub.s32 %s18, 1
      %s24 = ssub.s32 %s18, 2
      %s25 = sadd.s32 %s18, 1
      %s27 = sadd.s32 %s26, 1
      %p30 = scmp.eq.s32.totalorder %s18, 3
      %p31 = scmp.ne.s32.totalorder %s26, %s28
      %p32 = scmp.eq.s32.totalorder %s18, 0
      %p33 = por %p31, %p32
      %p34 = scmp.ne.s32.totalorder %s26, %s28
      %p35 = scmp.eq.s32.totalorder %s23, 3
      %p36 = por %p34, %p35
      %p37 = scmp.ne.s32.totalorder %s28, %s29
      %p38 = scmp.eq.s32.totalorder %s23, 0
      %p39 = por %p37, %p38
      %p40 = scmp.ne.s32.totalorder %s28, %s29
      %p41 = scmp.eq.s32.totalorder %s24, 3
      %p42 = por %p40, %p41
      %p44 = scmp.ne.s32.totalorder %s29, %s43
      %p45 = scmp.eq.s32.totalorder %s24, 0
      %p46 = por %p44, %p45
      %s48 = sadd.s32 %s47, 1
      %p51 = scmp.eq.s32.totalorder %s18, 3
      %p52 = scmp.ne.s32.totalorder %s47, %s49
      %p53 = scmp.eq.s32.totalorder %s18, 0
      %p54 = por %p52, %p53
      %p55 = scmp.ne.s32.totalorder %s47, %s49
      %p56 = scmp.eq.s32.totalorder %s23, 3
      %p57 = por %p55, %p56
      %p58 = scmp.ne.s32.totalorder %s49, %s50
      %p59 = scmp.eq.s32.totalorder %s23, 0
      %p60 = por %p58, %p59
      %p61 = scmp.ne.s32.totalorder %s49, %s50
      %p62 = scmp.eq.s32.totalorder %s24, 3
      %p63 = por %p61, %p62
      %p65 = scmp.ne.s32.totalorder %s50, %s64
      %p66 = scmp.eq.s32.totalorder %s24, 0
      %p67 = por %p65, %p66
      %s68 = ssub.s32 %s18, %s25
      %p69 = scmp.eq.s32.totalorder %s68, 0
      %s71 = sadd.s32 %s70, 1
      %s72 = scalar_select %p69, %s70, %s71
      %p75 = pneg %p69
      %p76 = scmp.eq.s32.totalorder %s18, 3
      %p77 = por %p75, %p76
      %p78 = scmp.ne.s32.totalorder %s70, %s73
      %p79 = scmp.eq.s32.totalorder %s18, 0
      %p80 = por %p78, %p79
      %p81 = scmp.ne.s32.totalorder %s70, %s73
      %p82 = scmp.eq.s32.totalorder %s23, 3
      %p83 = por %p81, %p82
      %p84 = scmp.ne.s32.totalorder %s73, %s74
      %p85 = scmp.eq.s32.totalorder %s23, 0
      %p86 = por %p84, %p85
      %p87 = scmp.ne.s32.totalorder %s73, %s74
      %p88 = scmp.eq.s32.totalorder %s24, 3
      %p89 = por %p87, %p88
      %p91 = scmp.ne.s32.totalorder %s74, %s90
      %p92 = scmp.eq.s32.totalorder %s24, 0
      %p93 = por %p91, %p92
      %s94 = ssub.s32 %s18, %s25
      %p95 = scmp.eq.s32.totalorder %s94, 0
      %s97 = sadd.s32 %s96, 1
      %s98 = scalar_select %p95, %s96, %s97
      %p101 = pneg %p95
      %p102 = scmp.eq.s32.totalorder %s18, 3
      %p103 = por %p101, %p102
      %p104 = scmp.ne.s32.totalorder %s96, %s99
      %p105 = scmp.eq.s32.totalorder %s18, 0
      %p106 = por %p104, %p105
      %p107 = scmp.ne.s32.totalorder %s96, %s99
      %p108 = scmp.eq.s32.totalorder %s23, 3
      %p109 = por %p107, %p108
      %p110 = scmp.ne.s32.totalorder %s99, %s100
      %p111 = scmp.eq.s32.totalorder %s23, 0
      %p112 = por %p110, %p111
      %p113 = scmp.ne.s32.totalorder %s99, %s100
      %p114 = scmp.eq.s32.totalorder %s24, 3
      %p115 = por %p113, %p114
      %p117 = scmp.ne.s32.totalorder %s100, %s116
      %p118 = scmp.eq.s32.totalorder %s24, 0
      %p119 = por %p117, %p118
      %s121 = sadd.s32 %s120, 1
      %p124 = scmp.eq.s32.totalorder %s18, 3
      %p125 = scmp.ne.s32.totalorder %s120, %s122
      %p126 = scmp.eq.s32.totalorder %s18, 0
      %p127 = por %p125, %p126
      %p128 = scmp.ne.s32.totalorder %s120, %s122
      %p129 = scmp.eq.s32.totalorder %s23, 3
      %p130 = por %p128, %p129
      %p131 = scmp.ne.s32.totalorder %s122, %s123
      %p132 = scmp.eq.s32.totalorder %s23, 0
      %p133 = por %p131, %p132
      %p134 = scmp.ne.s32.totalorder %s122, %s123
      %p135 = scmp.eq.s32.totalorder %s24, 3
      %p136 = por %p134, %p135
      %p138 = scmp.ne.s32.totalorder %s123, %s137
      %p139 = scmp.eq.s32.totalorder %s24, 0
      %p140 = por %p138, %p139
      %s142 = sadd.s32 %s141, 1
      %p145 = scmp.eq.s32.totalorder %s18, 3
      %p146 = scmp.ne.s32.totalorder %s141, %s143
      %p147 = scmp.eq.s32.totalorder %s18, 0
      %p148 = por %p146, %p147
      %p149 = scmp.ne.s32.totalorder %s141, %s143
      %p150 = scmp.eq.s32.totalorder %s23, 3
      %p151 = por %p149, %p150
      %p152 = scmp.ne.s32.totalorder %s143, %s144
      %p153 = scmp.eq.s32.totalorder %s23, 0
      %p154 = por %p152, %p153
      %p155 = scmp.ne.s32.totalorder %s143, %s144
      %p156 = scmp.eq.s32.totalorder %s24, 3
      %p157 = por %p155, %p156
      %p159 = scmp.ne.s32.totalorder %s144, %s158
      %p160 = scmp.eq.s32.totalorder %s24, 0
      %p161 = por %p159, %p160
      %p162 = scmp.le.s32.totalorder 1, %s18
      %p163 = scmp.lt.s32.totalorder %s18, 5
      %p164 = pnand %p162, %p163
      %p165 = pneg %p164
      // Predicated region
      $region9: #{cnn_model_forward.1} parent=5 // pred_check
        _
      $region10: #{cnn_model_forward.1} parent=5 // pred_check_branch
        %167 = sbr.rel (%p164) target = $region12
      $region11: #{cnn_model_forward.1} parent=5 // pred_region
        %s168 = ssub.s32 %s18, 1
        // Predicated region
        $region13: #{cnn_model_forward.1} parent=11 // pred_check
          %p169 = pneg %p39
        $region14: #{cnn_model_forward.1} parent=11 // pred_check_branch
          %171 = sbr.rel (%p169) target = $region16
        $region15: #{cnn_model_forward.1} parent=11 // pred_region
          _
        $region16: #{cnn_model_forward.1} parent=11 // pred_fallthru
          _
        // Predicated region
        $region17: #{cnn_model_forward.1} parent=11 // pred_check
          %p172 = pneg %p60
        $region18: #{cnn_model_forward.1} parent=11 // pred_check_branch
          %174 = sbr.rel (%p172) target = $region20
        $region19: #{cnn_model_forward.1} parent=11 // pred_region
          _
        $region20: #{cnn_model_forward.1} parent=11 // pred_fallthru
          _
        // Predicated region
        $region21: #{cnn_model_forward.1} parent=11 // pred_check
          %p175 = pneg %p133
        $region22: #{cnn_model_forward.1} parent=11 // pred_check_branch
          %177 = sbr.rel (%p175) target = $region24
        $region23: #{cnn_model_forward.1} parent=11 // pred_region
          %s179 = ssub.s32 128, 128
          %180 = vsyncadd [#allocation7], %s179
          %s182 = sshll.u32 [#allocation8], 4
          %s183 = int_to_ptr.vmem [resolvable:$true] %s182
          %185 = dma.hbm_to_vmem [thread:$0]  %s4, 128, %s183, [#allocation7]
        $region24: #{cnn_model_forward.1} parent=11 // pred_fallthru
          _
      $region12: #{cnn_model_forward.1} parent=5 // pred_fallthru
        _
      %p186 = scmp.lt.s32.totalorder %s18, 4
      // Predicated region
      $region25: #{cnn_model_forward.1} parent=5 // pred_check
        %p187 = pneg %p186
      $region26: #{cnn_model_forward.1} parent=5 // pred_check_branch
        %189 = sbr.rel (%p187) target = $region28
      $region27: #{cnn_model_forward.1} parent=5 // pred_region
        // Predicated region
        $region29: #{cnn_model_forward.1} parent=27 // pred_check
          %p190 = pneg %p80
        $region30: #{cnn_model_forward.1} parent=27 // pred_check_branch
          %192 = sbr.rel (%p190) target = $region32
        $region31: #{cnn_model_forward.1} parent=27 // pred_region
          %s193 = sand.u32 %s70, 1
          %s194 = scalar_lea.sflag [#allocation4], %s193
          %s195 = sand.u32 %s70, 1
          %s196 = smul.addr %s195, 1536
          %s197 = scalar_lea.vmem [#allocation3], %s196
          %s198 = smul.u32 4, %s18
          %s200 = ssub.s32 24576, 24576
          %201 = vsyncadd %s194, %s200
          %s202 = smul.addr %s198, 64
          %s203 = scalar_lea.hbm %s2, %s202
          %s204 = sshll.u32 %s197, 4
          %s205 = int_to_ptr.vmem [resolvable:$true] %s204
          %210 = dma.hbm_to_vmem [thread:$0]  %s203, 24576, %s205, %s194, 1024, 256, 16
        $region32: #{cnn_model_forward.1} parent=27 // pred_fallthru
          _
        // Predicated region
        $region33: #{cnn_model_forward.1} parent=27 // pred_check
          %p211 = pneg %p106
        $region34: #{cnn_model_forward.1} parent=27 // pred_check_branch
          %213 = sbr.rel (%p211) target = $region36
        $region35: #{cnn_model_forward.1} parent=27 // pred_region
          %s214 = sand.u32 %s18, 1
          %s215 = scalar_lea.sflag [#allocation7], %s214
          %s216 = sand.u32 %s96, 1
          %s217 = smul.addr %s216, 512
          %s218 = scalar_lea.vmem [#allocation6], %s217
          %s219 = smul.u32 64, %s18
          %s221 = ssub.s32 8192, 8192
          %222 = vsyncadd %s215, %s221
          %s223 = smul.addr %s219, 128
          %s224 = scalar_lea.hbm %s3, %s223
          %s225 = sshll.u32 %s218, 4
          %s226 = int_to_ptr.vmem [resolvable:$true] %s225
          %231 = dma.hbm_to_vmem [thread:$0]  %s224, 8192, %s226, %s215, 128, 128, 8
        $region36: #{cnn_model_forward.1} parent=27 // pred_fallthru
          _
      $region28: #{cnn_model_forward.1} parent=5 // pred_fallthru
        _
      %p232 = scmp.le.s32.totalorder 1, %s18
      %p233 = scmp.lt.s32.totalorder %s18, 5
      %p234 = pnand %p232, %p233
      %p235 = pneg %p234
      // Predicated region
      $region37: #{cnn_model_forward.1} parent=5 // pred_check
        _
      $region38: #{cnn_model_forward.1} parent=5 // pred_check_branch
        %237 = sbr.rel (%p234) target = $region40
      $region39: #{cnn_model_forward.1} parent=5 // pred_region
        %s238 = ssub.s32 %s18, 1
        %s239 = sand.u32 %s73, 1
        %s240 = scalar_lea.sflag [#allocation4], %s239
        %s241 = sand.u32 %s73, 1
        %s242 = smul.addr %s241, 1536
        %s243 = scalar_lea.vmem [#allocation3], %s242
        // Predicated region
        $region41: #{cnn_model_forward.1} parent=39 // pred_check
          %p244 = pneg %p86
        $region42: #{cnn_model_forward.1} parent=39 // pred_check_branch
          %246 = sbr.rel (%p244) target = $region44
        $region43: #{cnn_model_forward.1} parent=39 // pred_region
          %247 = dma.done %s240, 24576
        $region44: #{cnn_model_forward.1} parent=39 // pred_fallthru
          _
        %s248 = sand.u32 %s23, 1
        %s249 = scalar_lea.sflag [#allocation7], %s248
        %s250 = sand.u32 %s99, 1
        %s251 = smul.addr %s250, 512
        %s252 = scalar_lea.vmem [#allocation6], %s251
        // Predicated region
        $region45: #{cnn_model_forward.1} parent=39 // pred_check
          %p253 = pneg %p112
        $region46: #{cnn_model_forward.1} parent=39 // pred_check_branch
          %255 = sbr.rel (%p253) target = $region48
        $region47: #{cnn_model_forward.1} parent=39 // pred_region
          %256 = dma.done %s249, 8192
        $region48: #{cnn_model_forward.1} parent=39 // pred_fallthru
          _
        // Predicated region
        $region49: #{cnn_model_forward.1} parent=39 // pred_check
          %p257 = pneg %p133
        $region50: #{cnn_model_forward.1} parent=39 // pred_check_branch
          %259 = sbr.rel (%p257) target = $region52
        $region51: #{cnn_model_forward.1} parent=39 // pred_region
          %260 = dma.done [#allocation7], 128
        $region52: #{cnn_model_forward.1} parent=39 // pred_fallthru
          _
        %p261 = pneg %p39
        %p262 = pneg %p36
        %p263 = pneg %p60
        %p264 = pneg %p57
        %s265 = sand.u32 %s73, 1
        %s266 = scalar_lea.sflag [#allocation4], %s265
        %s267 = sand.u32 %s73, 1
        %s268 = smul.addr %s267, 1536
        %s269 = scalar_lea.vmem [#allocation3], %s268
        %p270 = pneg %p86
        %p271 = pneg %p83
        %s272 = sand.u32 %s23, 1
        %s273 = scalar_lea.sflag [#allocation7], %s272
        %s274 = sand.u32 %s99, 1
        %s275 = smul.addr %s274, 512
        %s276 = scalar_lea.vmem [#allocation6], %s275
        %p277 = pneg %p112
        %p278 = pneg %p109
        %p279 = pneg %p133
        %p280 = pneg %p130
        %p281 = pneg %p154
        %p282 = pneg %p151
        %s283 = smul.u32 4, %s23
        %s284 = smul.u32 64, %s23
        %p285 = scmp.eq.s32.totalorder %s23, 0
        // Predicated region
        $region53: #{cnn_model_forward.1} parent=39 // pred_check
          %p286 = pneg %p285
        $region54: #{cnn_model_forward.1} parent=39 // pred_check_branch
          %288 = sbr.rel (%p286) target = $region56
        $region55: #{cnn_model_forward.1} parent=39 // pred_region
          %289 = vst [vmem:[#allocation2] sm:$0x3] 0.0
        $region56: #{cnn_model_forward.1} parent=39 // pred_fallthru
          _
        %v290 = vld [vmem:[%s1] sm:$0xff]
        %v291 = vld [vmem:[%s1 + $0x8] sm:$0xff]
        %v292 = vld [vmem:[%s1 + $0x10] sm:$0xff]
        %v293 = vld [vmem:[%s1 + $0x18] sm:$0xff]
        %v294 = vld [vmem:[%s1 + $0x20] sm:$0xff]
        %v295 = vld [vmem:[%s1 + $0x28] sm:$0xff]
        %v296 = vpack.c.bf16 %v290, %v290
        %v297 = vpack.c.bf16 %v291, %v291
        %v298 = vpack.c.bf16 %v292, %v292
        %v299 = vpack.c.bf16 %v293, %v293
        %v300 = vpack.c.bf16 %v294, %v294
        %v301 = vpack.c.bf16 %v295, %v295
        %v302 = vld [vmem:[%s243] sm:$0xff]
        %v303 = vld [vmem:[%s243 + $0x8] sm:$0xff]
        %v304 = vld [vmem:[%s243 + $0x10] sm:$0xff]
        %v305 = vld [vmem:[%s243 + $0x18] sm:$0xff]
        %v306 = vld [vmem:[%s243 + $0x20] sm:$0xff]
        %v307 = vld [vmem:[%s243 + $0x28] sm:$0xff]
        %v308 = vld [vmem:[%s243 + $0x30] sm:$0xff]
        %v309 = vld [vmem:[%s243 + $0x38] sm:$0xff]
        %v310 = vld [vmem:[%s243 + $0x40] sm:$0xff]
        %v311 = vld [vmem:[%s243 + $0x48] sm:$0xff]
        %v312 = vld [vmem:[%s243 + $0x50] sm:$0xff]
        %v313 = vld [vmem:[%s243 + $0x58] sm:$0xff]
        %v314 = vld [vmem:[%s243 + $0x60] sm:$0xff]
        %v315 = vld [vmem:[%s243 + $0x68] sm:$0xff]
        %v316 = vld [vmem:[%s243 + $0x70] sm:$0xff]
        %v317 = vld [vmem:[%s243 + $0x78] sm:$0xff]
        %v318 = vld [vmem:[%s243 + $0x80] sm:$0xff]
        %v319 = vld [vmem:[%s243 + $0x88] sm:$0xff]
        %v320 = vld [vmem:[%s243 + $0x90] sm:$0xff]
        %v321 = vld [vmem:[%s243 + $0x98] sm:$0xff]
        %v322 = vld [vmem:[%s243 + $0xa0] sm:$0xff]
        %v323 = vld [vmem:[%s243 + $0xa8] sm:$0xff]
        %v324 = vld [vmem:[%s243 + $0xb0] sm:$0xff]
        %v325 = vld [vmem:[%s243 + $0xb8] sm:$0xff]
        %v326 = vld [vmem:[%s243 + $0xc0] sm:$0xff]
        %v327 = vld [vmem:[%s243 + $0xc8] sm:$0xff]
        %v328 = vld [vmem:[%s243 + $0xd0] sm:$0xff]
        %v329 = vld [vmem:[%s243 + $0xd8] sm:$0xff]
        %v330 = vld [vmem:[%s243 + $0xe0] sm:$0xff]
        %v331 = vld [vmem:[%s243 + $0xe8] sm:$0xff]
        %v332 = vld [vmem:[%s243 + $0xf0] sm:$0xff]
        %v333 = vld [vmem:[%s243 + $0xf8] sm:$0xff]
        %v334 = vld [vmem:[%s243 + $0x100] sm:$0xff]
        %v335 = vld [vmem:[%s243 + $0x108] sm:$0xff]
        %v336 = vld [vmem:[%s243 + $0x110] sm:$0xff]
        %v337 = vld [vmem:[%s243 + $0x118] sm:$0xff]
        %v338 = vld [vmem:[%s243 + $0x120] sm:$0xff]
        %v339 = vld [vmem:[%s243 + $0x128] sm:$0xff]
        %v340 = vld [vmem:[%s243 + $0x130] sm:$0xff]
        %v341 = vld [vmem:[%s243 + $0x138] sm:$0xff]
        %v342 = vld [vmem:[%s243 + $0x140] sm:$0xff]
        %v343 = vld [vmem:[%s243 + $0x148] sm:$0xff]
        %v344 = vld [vmem:[%s243 + $0x150] sm:$0xff]
        %v345 = vld [vmem:[%s243 + $0x158] sm:$0xff]
        %v346 = vld [vmem:[%s243 + $0x160] sm:$0xff]
        %v347 = vld [vmem:[%s243 + $0x168] sm:$0xff]
        %v348 = vld [vmem:[%s243 + $0x170] sm:$0xff]
        %v349 = vld [vmem:[%s243 + $0x178] sm:$0xff]
        %v350 = vld [vmem:[%s243 + $0x180] sm:$0xff]
        %v351 = vld [vmem:[%s243 + $0x188] sm:$0xff]
        %v352 = vld [vmem:[%s243 + $0x190] sm:$0xff]
        %v353 = vld [vmem:[%s243 + $0x198] sm:$0xff]
        %v354 = vld [vmem:[%s243 + $0x1a0] sm:$0xff]
        %v355 = vld [vmem:[%s243 + $0x1a8] sm:$0xff]
        %v356 = vld [vmem:[%s243 + $0x1b0] sm:$0xff]
        %v357 = vld [vmem:[%s243 + $0x1b8] sm:$0xff]
        %v358 = vld [vmem:[%s243 + $0x1c0] sm:$0xff]
        %v359 = vld [vmem:[%s243 + $0x1c8] sm:$0xff]
        %v360 = vld [vmem:[%s243 + $0x1d0] sm:$0xff]
        %v361 = vld [vmem:[%s243 + $0x1d8] sm:$0xff]
        %v362 = vld [vmem:[%s243 + $0x1e0] sm:$0xff]
        %v363 = vld [vmem:[%s243 + $0x1e8] sm:$0xff]
        %v364 = vld [vmem:[%s243 + $0x1f0] sm:$0xff]
        %v365 = vld [vmem:[%s243 + $0x1f8] sm:$0xff]
        %v366 = vld [vmem:[%s243 + $0x200] sm:$0xff]
        %v367 = vld [vmem:[%s243 + $0x208] sm:$0xff]
        %v368 = vld [vmem:[%s243 + $0x210] sm:$0xff]
        %v369 = vld [vmem:[%s243 + $0x218] sm:$0xff]
        %v370 = vld [vmem:[%s243 + $0x220] sm:$0xff]
        %v371 = vld [vmem:[%s243 + $0x228] sm:$0xff]
        %v372 = vld [vmem:[%s243 + $0x230] sm:$0xff]
        %v373 = vld [vmem:[%s243 + $0x238] sm:$0xff]
        %v374 = vld [vmem:[%s243 + $0x240] sm:$0xff]
        %v375 = vld [vmem:[%s243 + $0x248] sm:$0xff]
        %v376 = vld [vmem:[%s243 + $0x250] sm:$0xff]
        %v377 = vld [vmem:[%s243 + $0x258] sm:$0xff]
        %v378 = vld [vmem:[%s243 + $0x260] sm:$0xff]
        %v379 = vld [vmem:[%s243 + $0x268] sm:$0xff]
        %v380 = vld [vmem:[%s243 + $0x270] sm:$0xff]
        %v381 = vld [vmem:[%s243 + $0x278] sm:$0xff]
        %v382 = vld [vmem:[%s243 + $0x280] sm:$0xff]
        %v383 = vld [vmem:[%s243 + $0x288] sm:$0xff]
        %v384 = vld [vmem:[%s243 + $0x290] sm:$0xff]
        %v385 = vld [vmem:[%s243 + $0x298] sm:$0xff]
        %v386 = vld [vmem:[%s243 + $0x2a0] sm:$0xff]
        %v387 = vld [vmem:[%s243 + $0x2a8] sm:$0xff]
        %v388 = vld [vmem:[%s243 + $0x2b0] sm:$0xff]
        %v389 = vld [vmem:[%s243 + $0x2b8] sm:$0xff]
        %v390 = vld [vmem:[%s243 + $0x2c0] sm:$0xff]
        %v391 = vld [vmem:[%s243 + $0x2c8] sm:$0xff]
        %v392 = vld [vmem:[%s243 + $0x2d0] sm:$0xff]
        %v393 = vld [vmem:[%s243 + $0x2d8] sm:$0xff]
        %v394 = vld [vmem:[%s243 + $0x2e0] sm:$0xff]
        %v395 = vld [vmem:[%s243 + $0x2e8] sm:$0xff]
        %v396 = vld [vmem:[%s243 + $0x2f0] sm:$0xff]
        %v397 = vld [vmem:[%s243 + $0x2f8] sm:$0xff]
        %v398 = vld [vmem:[%s243 + $0x300] sm:$0xff]
        %v399 = vld [vmem:[%s243 + $0x308] sm:$0xff]
        %v400 = vld [vmem:[%s243 + $0x310] sm:$0xff]
        %v401 = vld [vmem:[%s243 + $0x318] sm:$0xff]
        %v402 = vld [vmem:[%s243 + $0x320] sm:$0xff]
        %v403 = vld [vmem:[%s243 + $0x328] sm:$0xff]
        %v404 = vld [vmem:[%s243 + $0x330] sm:$0xff]
        %v405 = vld [vmem:[%s243 + $0x338] sm:$0xff]
        %v406 = vld [vmem:[%s243 + $0x340] sm:$0xff]
        %v407 = vld [vmem:[%s243 + $0x348] sm:$0xff]
        %v408 = vld [vmem:[%s243 + $0x350] sm:$0xff]
        %v409 = vld [vmem:[%s243 + $0x358] sm:$0xff]
        %v410 = vld [vmem:[%s243 + $0x360] sm:$0xff]
        %v411 = vld [vmem:[%s243 + $0x368] sm:$0xff]
        %v412 = vld [vmem:[%s243 + $0x370] sm:$0xff]
        %v413 = vld [vmem:[%s243 + $0x378] sm:$0xff]
        %v414 = vld [vmem:[%s243 + $0x380] sm:$0xff]
        %v415 = vld [vmem:[%s243 + $0x388] sm:$0xff]
        %v416 = vld [vmem:[%s243 + $0x390] sm:$0xff]
        %v417 = vld [vmem:[%s243 + $0x398] sm:$0xff]
        %v418 = vld [vmem:[%s243 + $0x3a0] sm:$0xff]
        %v419 = vld [vmem:[%s243 + $0x3a8] sm:$0xff]
        %v420 = vld [vmem:[%s243 + $0x3b0] sm:$0xff]
        %v421 = vld [vmem:[%s243 + $0x3b8] sm:$0xff]
        %v422 = vld [vmem:[%s243 + $0x3c0] sm:$0xff]
        %v423 = vld [vmem:[%s243 + $0x3c8] sm:$0xff]
        %v424 = vld [vmem:[%s243 + $0x3d0] sm:$0xff]
        %v425 = vld [vmem:[%s243 + $0x3d8] sm:$0xff]
        %v426 = vld [vmem:[%s243 + $0x3e0] sm:$0xff]
        %v427 = vld [vmem:[%s243 + $0x3e8] sm:$0xff]
        %v428 = vld [vmem:[%s243 + $0x3f0] sm:$0xff]
        %v429 = vld [vmem:[%s243 + $0x3f8] sm:$0xff]
        %v430 = vld [vmem:[%s243 + $0x400] sm:$0xff]
        %v431 = vld [vmem:[%s243 + $0x408] sm:$0xff]
        %v432 = vld [vmem:[%s243 + $0x410] sm:$0xff]
        %v433 = vld [vmem:[%s243 + $0x418] sm:$0xff]
        %v434 = vld [vmem:[%s243 + $0x420] sm:$0xff]
        %v435 = vld [vmem:[%s243 + $0x428] sm:$0xff]
        %v436 = vld [vmem:[%s243 + $0x430] sm:$0xff]
        %v437 = vld [vmem:[%s243 + $0x438] sm:$0xff]
        %v438 = vld [vmem:[%s243 + $0x440] sm:$0xff]
        %v439 = vld [vmem:[%s243 + $0x448] sm:$0xff]
        %v440 = vld [vmem:[%s243 + $0x450] sm:$0xff]
        %v441 = vld [vmem:[%s243 + $0x458] sm:$0xff]
        %v442 = vld [vmem:[%s243 + $0x460] sm:$0xff]
        %v443 = vld [vmem:[%s243 + $0x468] sm:$0xff]
        %v444 = vld [vmem:[%s243 + $0x470] sm:$0xff]
        %v445 = vld [vmem:[%s243 + $0x478] sm:$0xff]
        %v446 = vld [vmem:[%s243 + $0x480] sm:$0xff]
        %v447 = vld [vmem:[%s243 + $0x488] sm:$0xff]
        %v448 = vld [vmem:[%s243 + $0x490] sm:$0xff]
        %v449 = vld [vmem:[%s243 + $0x498] sm:$0xff]
        %v450 = vld [vmem:[%s243 + $0x4a0] sm:$0xff]
        %v451 = vld [vmem:[%s243 + $0x4a8] sm:$0xff]
        %v452 = vld [vmem:[%s243 + $0x4b0] sm:$0xff]
        %v453 = vld [vmem:[%s243 + $0x4b8] sm:$0xff]
        %v454 = vld [vmem:[%s243 + $0x4c0] sm:$0xff]
        %v455 = vld [vmem:[%s243 + $0x4c8] sm:$0xff]
        %v456 = vld [vmem:[%s243 + $0x4d0] sm:$0xff]
        %v457 = vld [vmem:[%s243 + $0x4d8] sm:$0xff]
        %v458 = vld [vmem:[%s243 + $0x4e0] sm:$0xff]
        %v459 = vld [vmem:[%s243 + $0x4e8] sm:$0xff]
        %v460 = vld [vmem:[%s243 + $0x4f0] sm:$0xff]
        %v461 = vld [vmem:[%s243 + $0x4f8] sm:$0xff]
        %v462 = vld [vmem:[%s243 + $0x500] sm:$0xff]
        %v463 = vld [vmem:[%s243 + $0x508] sm:$0xff]
        %v464 = vld [vmem:[%s243 + $0x510] sm:$0xff]
        %v465 = vld [vmem:[%s243 + $0x518] sm:$0xff]
        %v466 = vld [vmem:[%s243 + $0x520] sm:$0xff]
        %v467 = vld [vmem:[%s243 + $0x528] sm:$0xff]
        %v468 = vld [vmem:[%s243 + $0x530] sm:$0xff]
        %v469 = vld [vmem:[%s243 + $0x538] sm:$0xff]
        %v470 = vld [vmem:[%s243 + $0x540] sm:$0xff]
        %v471 = vld [vmem:[%s243 + $0x548] sm:$0xff]
        %v472 = vld [vmem:[%s243 + $0x550] sm:$0xff]
        %v473 = vld [vmem:[%s243 + $0x558] sm:$0xff]
        %v474 = vld [vmem:[%s243 + $0x560] sm:$0xff]
        %v475 = vld [vmem:[%s243 + $0x568] sm:$0xff]
        %v476 = vld [vmem:[%s243 + $0x570] sm:$0xff]
        %v477 = vld [vmem:[%s243 + $0x578] sm:$0xff]
        %v478 = vld [vmem:[%s243 + $0x580] sm:$0xff]
        %v479 = vld [vmem:[%s243 + $0x588] sm:$0xff]
        %v480 = vld [vmem:[%s243 + $0x590] sm:$0xff]
        %v481 = vld [vmem:[%s243 + $0x598] sm:$0xff]
        %v482 = vld [vmem:[%s243 + $0x5a0] sm:$0xff]
        %v483 = vld [vmem:[%s243 + $0x5a8] sm:$0xff]
        %v484 = vld [vmem:[%s243 + $0x5b0] sm:$0xff]
        %v485 = vld [vmem:[%s243 + $0x5b8] sm:$0xff]
        %v486 = vld [vmem:[%s243 + $0x5c0] sm:$0xff]
        %v487 = vld [vmem:[%s243 + $0x5c8] sm:$0xff]
        %v488 = vld [vmem:[%s243 + $0x5d0] sm:$0xff]
        %v489 = vld [vmem:[%s243 + $0x5d8] sm:$0xff]
        %v490 = vld [vmem:[%s243 + $0x5e0] sm:$0xff]
        %v491 = vld [vmem:[%s243 + $0x5e8] sm:$0xff]
        %v492 = vld [vmem:[%s243 + $0x5f0] sm:$0xff]
        %v493 = vld [vmem:[%s243 + $0x5f8] sm:$0xff]
        %v686 = vunpack.c.l.b16 %v302
        %v687 = vunpack.c.h.b16 %v302
        %v688 = vunpack.c.l.b16 %v303
        %v689 = vunpack.c.h.b16 %v303
        %v690 = vunpack.c.l.b16 %v304
        %v691 = vunpack.c.h.b16 %v304
        %v692 = vunpack.c.l.b16 %v305
        %v693 = vunpack.c.h.b16 %v305
        %v694 = vunpack.c.l.b16 %v306
        %v695 = vunpack.c.h.b16 %v306
        %v696 = vunpack.c.l.b16 %v307
        %v697 = vunpack.c.h.b16 %v307
        %v698 = vunpack.c.l.b16 %v308
        %v699 = vunpack.c.h.b16 %v308
        %v700 = vunpack.c.l.b16 %v309
        %v701 = vunpack.c.h.b16 %v309
        %v702 = vunpack.c.l.b16 %v310
        %v703 = vunpack.c.h.b16 %v310
        %v704 = vunpack.c.l.b16 %v311
        %v705 = vunpack.c.h.b16 %v311
        %v706 = vunpack.c.l.b16 %v312
        %v707 = vunpack.c.h.b16 %v312
        %v708 = vunpack.c.l.b16 %v313
        %v709 = vunpack.c.h.b16 %v313
        %v710 = vunpack.c.l.b16 %v314
        %v711 = vunpack.c.h.b16 %v314
        %v712 = vunpack.c.l.b16 %v315
        %v713 = vunpack.c.h.b16 %v315
        %v714 = vunpack.c.l.b16 %v316
        %v715 = vunpack.c.h.b16 %v316
        %v716 = vunpack.c.l.b16 %v317
        %v717 = vunpack.c.h.b16 %v317
        %v718 = vunpack.c.l.b16 %v318
        %v719 = vunpack.c.h.b16 %v318
        %v720 = vunpack.c.l.b16 %v319
        %v721 = vunpack.c.h.b16 %v319
        %v722 = vunpack.c.l.b16 %v320
        %v723 = vunpack.c.h.b16 %v320
        %v724 = vunpack.c.l.b16 %v321
        %v725 = vunpack.c.h.b16 %v321
        %v726 = vunpack.c.l.b16 %v322
        %v727 = vunpack.c.h.b16 %v322
        %v728 = vunpack.c.l.b16 %v323
        %v729 = vunpack.c.h.b16 %v323
        %v730 = vunpack.c.l.b16 %v324
        %v731 = vunpack.c.h.b16 %v324
        %v732 = vunpack.c.l.b16 %v325
        %v733 = vunpack.c.h.b16 %v325
        %v734 = vunpack.c.l.b16 %v326
        %v735 = vunpack.c.h.b16 %v326
        %v736 = vunpack.c.l.b16 %v327
        %v737 = vunpack.c.h.b16 %v327
        %v738 = vunpack.c.l.b16 %v328
        %v739 = vunpack.c.h.b16 %v328
        %v740 = vunpack.c.l.b16 %v329
        %v741 = vunpack.c.h.b16 %v329
        %v742 = vunpack.c.l.b16 %v330
        %v743 = vunpack.c.h.b16 %v330
        %v744 = vunpack.c.l.b16 %v331
        %v745 = vunpack.c.h.b16 %v331
        %v746 = vunpack.c.l.b16 %v332
        %v747 = vunpack.c.h.b16 %v332
        %v748 = vunpack.c.l.b16 %v333
        %v749 = vunpack.c.h.b16 %v333
        %v750 = vunpack.c.l.b16 %v334
        %v751 = vunpack.c.h.b16 %v334
        %v752 = vunpack.c.l.b16 %v335
        %v753 = vunpack.c.h.b16 %v335
        %v754 = vunpack.c.l.b16 %v336
        %v755 = vunpack.c.h.b16 %v336
        %v756 = vunpack.c.l.b16 %v337
        %v757 = vunpack.c.h.b16 %v337
        %v758 = vunpack.c.l.b16 %v338
        %v759 = vunpack.c.h.b16 %v338
        %v760 = vunpack.c.l.b16 %v339
        %v761 = vunpack.c.h.b16 %v339
        %v762 = vunpack.c.l.b16 %v340
        %v763 = vunpack.c.h.b16 %v340
        %v764 = vunpack.c.l.b16 %v341
        %v765 = vunpack.c.h.b16 %v341
        %v766 = vunpack.c.l.b16 %v342
        %v767 = vunpack.c.h.b16 %v342
        %v768 = vunpack.c.l.b16 %v343
        %v769 = vunpack.c.h.b16 %v343
        %v770 = vunpack.c.l.b16 %v344
        %v771 = vunpack.c.h.b16 %v344
        %v772 = vunpack.c.l.b16 %v345
        %v773 = vunpack.c.h.b16 %v345
        %v774 = vunpack.c.l.b16 %v346
        %v775 = vunpack.c.h.b16 %v346
        %v776 = vunpack.c.l.b16 %v347
        %v777 = vunpack.c.h.b16 %v347
        %v778 = vunpack.c.l.b16 %v348
        %v779 = vunpack.c.h.b16 %v348
        %v780 = vunpack.c.l.b16 %v349
        %v781 = vunpack.c.h.b16 %v349
        %v782 = vunpack.c.l.b16 %v350
        %v783 = vunpack.c.h.b16 %v350
        %v784 = vunpack.c.l.b16 %v351
        %v785 = vunpack.c.h.b16 %v351
        %v786 = vunpack.c.l.b16 %v352
        %v787 = vunpack.c.h.b16 %v352
        %v788 = vunpack.c.l.b16 %v353
        %v789 = vunpack.c.h.b16 %v353
        %v790 = vunpack.c.l.b16 %v354
        %v791 = vunpack.c.h.b16 %v354
        %v792 = vunpack.c.l.b16 %v355
        %v793 = vunpack.c.h.b16 %v355
        %v794 = vunpack.c.l.b16 %v356
        %v795 = vunpack.c.h.b16 %v356
        %v796 = vunpack.c.l.b16 %v357
        %v797 = vunpack.c.h.b16 %v357
        %v798 = vunpack.c.l.b16 %v358
        %v799 = vunpack.c.h.b16 %v358
        %v800 = vunpack.c.l.b16 %v359
        %v801 = vunpack.c.h.b16 %v359
        %v802 = vunpack.c.l.b16 %v360
        %v803 = vunpack.c.h.b16 %v360
        %v804 = vunpack.c.l.b16 %v361
        %v805 = vunpack.c.h.b16 %v361
        %v806 = vunpack.c.l.b16 %v362
        %v807 = vunpack.c.h.b16 %v362
        %v808 = vunpack.c.l.b16 %v363
        %v809 = vunpack.c.h.b16 %v363
        %v810 = vunpack.c.l.b16 %v364
        %v811 = vunpack.c.h.b16 %v364
        %v812 = vunpack.c.l.b16 %v365
        %v813 = vunpack.c.h.b16 %v365
        %v814 = vunpack.c.l.b16 %v366
        %v815 = vunpack.c.h.b16 %v366
        %v816 = vunpack.c.l.b16 %v367
        %v817 = vunpack.c.h.b16 %v367
        %v818 = vunpack.c.l.b16 %v368
        %v819 = vunpack.c.h.b16 %v368
        %v820 = vunpack.c.l.b16 %v369
        %v821 = vunpack.c.h.b16 %v369
        %v822 = vunpack.c.l.b16 %v370
        %v823 = vunpack.c.h.b16 %v370
        %v824 = vunpack.c.l.b16 %v371
        %v825 = vunpack.c.h.b16 %v371
        %v826 = vunpack.c.l.b16 %v372
        %v827 = vunpack.c.h.b16 %v372
        %v828 = vunpack.c.l.b16 %v373
        %v829 = vunpack.c.h.b16 %v373
        %v830 = vunpack.c.l.b16 %v374
        %v831 = vunpack.c.h.b16 %v374
        %v832 = vunpack.c.l.b16 %v375
        %v833 = vunpack.c.h.b16 %v375
        %v834 = vunpack.c.l.b16 %v376
        %v835 = vunpack.c.h.b16 %v376
        %v836 = vunpack.c.l.b16 %v377
        %v837 = vunpack.c.h.b16 %v377
        %v838 = vunpack.c.l.b16 %v378
        %v839 = vunpack.c.h.b16 %v378
        %v840 = vunpack.c.l.b16 %v379
        %v841 = vunpack.c.h.b16 %v379
        %v842 = vunpack.c.l.b16 %v380
        %v843 = vunpack.c.h.b16 %v380
        %v844 = vunpack.c.l.b16 %v381
        %v845 = vunpack.c.h.b16 %v381
        %v846 = vunpack.c.l.b16 %v382
        %v847 = vunpack.c.h.b16 %v382
        %v848 = vunpack.c.l.b16 %v383
        %v849 = vunpack.c.h.b16 %v383
        %v850 = vunpack.c.l.b16 %v384
        %v851 = vunpack.c.h.b16 %v384
        %v852 = vunpack.c.l.b16 %v385
        %v853 = vunpack.c.h.b16 %v385
        %v854 = vunpack.c.l.b16 %v386
        %v855 = vunpack.c.h.b16 %v386
        %v856 = vunpack.c.l.b16 %v387
        %v857 = vunpack.c.h.b16 %v387
        %v858 = vunpack.c.l.b16 %v388
        %v859 = vunpack.c.h.b16 %v388
        %v860 = vunpack.c.l.b16 %v389
        %v861 = vunpack.c.h.b16 %v389
        %v862 = vunpack.c.l.b16 %v390
        %v863 = vunpack.c.h.b16 %v390
        %v864 = vunpack.c.l.b16 %v391
        %v865 = vunpack.c.h.b16 %v391
        %v866 = vunpack.c.l.b16 %v392
        %v867 = vunpack.c.h.b16 %v392
        %v868 = vunpack.c.l.b16 %v393
        %v869 = vunpack.c.h.b16 %v393
        %v870 = vunpack.c.l.b16 %v394
        %v871 = vunpack.c.h.b16 %v394
        %v872 = vunpack.c.l.b16 %v395
        %v873 = vunpack.c.h.b16 %v395
        %v874 = vunpack.c.l.b16 %v396
        %v875 = vunpack.c.h.b16 %v396
        %v876 = vunpack.c.l.b16 %v397
        %v877 = vunpack.c.h.b16 %v397
        %v878 = vunpack.c.l.b16 %v398
        %v879 = vunpack.c.h.b16 %v398
        %v880 = vunpack.c.l.b16 %v399
        %v881 = vunpack.c.h.b16 %v399
        %v882 = vunpack.c.l.b16 %v400
        %v883 = vunpack.c.h.b16 %v400
        %v884 = vunpack.c.l.b16 %v401
        %v885 = vunpack.c.h.b16 %v401
        %v886 = vunpack.c.l.b16 %v402
        %v887 = vunpack.c.h.b16 %v402
        %v888 = vunpack.c.l.b16 %v403
        %v889 = vunpack.c.h.b16 %v403
        %v890 = vunpack.c.l.b16 %v404
        %v891 = vunpack.c.h.b16 %v404
        %v892 = vunpack.c.l.b16 %v405
        %v893 = vunpack.c.h.b16 %v405
        %v894 = vunpack.c.l.b16 %v406
        %v895 = vunpack.c.h.b16 %v406
        %v896 = vunpack.c.l.b16 %v407
        %v897 = vunpack.c.h.b16 %v407
        %v898 = vunpack.c.l.b16 %v408
        %v899 = vunpack.c.h.b16 %v408
        %v900 = vunpack.c.l.b16 %v409
        %v901 = vunpack.c.h.b16 %v409
        %v902 = vunpack.c.l.b16 %v410
        %v903 = vunpack.c.h.b16 %v410
        %v904 = vunpack.c.l.b16 %v411
        %v905 = vunpack.c.h.b16 %v411
        %v906 = vunpack.c.l.b16 %v412
        %v907 = vunpack.c.h.b16 %v412
        %v908 = vunpack.c.l.b16 %v413
        %v909 = vunpack.c.h.b16 %v413
        %v910 = vunpack.c.l.b16 %v414
        %v911 = vunpack.c.h.b16 %v414
        %v912 = vunpack.c.l.b16 %v415
        %v913 = vunpack.c.h.b16 %v415
        %v914 = vunpack.c.l.b16 %v416
        %v915 = vunpack.c.h.b16 %v416
        %v916 = vunpack.c.l.b16 %v417
        %v917 = vunpack.c.h.b16 %v417
        %v918 = vunpack.c.l.b16 %v418
        %v919 = vunpack.c.h.b16 %v418
        %v920 = vunpack.c.l.b16 %v419
        %v921 = vunpack.c.h.b16 %v419
        %v922 = vunpack.c.l.b16 %v420
        %v923 = vunpack.c.h.b16 %v420
        %v924 = vunpack.c.l.b16 %v421
        %v925 = vunpack.c.h.b16 %v421
        %v926 = vunpack.c.l.b16 %v422
        %v927 = vunpack.c.h.b16 %v422
        %v928 = vunpack.c.l.b16 %v423
        %v929 = vunpack.c.h.b16 %v423
        %v930 = vunpack.c.l.b16 %v424
        %v931 = vunpack.c.h.b16 %v424
        %v932 = vunpack.c.l.b16 %v425
        %v933 = vunpack.c.h.b16 %v425
        %v934 = vunpack.c.l.b16 %v426
        %v935 = vunpack.c.h.b16 %v426
        %v936 = vunpack.c.l.b16 %v427
        %v937 = vunpack.c.h.b16 %v427
        %v938 = vunpack.c.l.b16 %v428
        %v939 = vunpack.c.h.b16 %v428
        %v940 = vunpack.c.l.b16 %v429
        %v941 = vunpack.c.h.b16 %v429
        %v942 = vunpack.c.l.b16 %v430
        %v943 = vunpack.c.h.b16 %v430
        %v944 = vunpack.c.l.b16 %v431
        %v945 = vunpack.c.h.b16 %v431
        %v946 = vunpack.c.l.b16 %v432
        %v947 = vunpack.c.h.b16 %v432
        %v948 = vunpack.c.l.b16 %v433
        %v949 = vunpack.c.h.b16 %v433
        %v950 = vunpack.c.l.b16 %v434
        %v951 = vunpack.c.h.b16 %v434
        %v952 = vunpack.c.l.b16 %v435
        %v953 = vunpack.c.h.b16 %v435
        %v954 = vunpack.c.l.b16 %v436
        %v955 = vunpack.c.h.b16 %v436
        %v956 = vunpack.c.l.b16 %v437
        %v957 = vunpack.c.h.b16 %v437
        %v958 = vunpack.c.l.b16 %v438
        %v959 = vunpack.c.h.b16 %v438
        %v960 = vunpack.c.l.b16 %v439
        %v961 = vunpack.c.h.b16 %v439
        %v962 = vunpack.c.l.b16 %v440
        %v963 = vunpack.c.h.b16 %v440
        %v964 = vunpack.c.l.b16 %v441
        %v965 = vunpack.c.h.b16 %v441
        %v966 = vunpack.c.l.b16 %v442
        %v967 = vunpack.c.h.b16 %v442
        %v968 = vunpack.c.l.b16 %v443
        %v969 = vunpack.c.h.b16 %v443
        %v970 = vunpack.c.l.b16 %v444
        %v971 = vunpack.c.h.b16 %v444
        %v972 = vunpack.c.l.b16 %v445
        %v973 = vunpack.c.h.b16 %v445
        %v974 = vunpack.c.l.b16 %v446
        %v975 = vunpack.c.h.b16 %v446
        %v976 = vunpack.c.l.b16 %v447
        %v977 = vunpack.c.h.b16 %v447
        %v978 = vunpack.c.l.b16 %v448
        %v979 = vunpack.c.h.b16 %v448
        %v980 = vunpack.c.l.b16 %v449
        %v981 = vunpack.c.h.b16 %v449
        %v982 = vunpack.c.l.b16 %v450
        %v983 = vunpack.c.h.b16 %v450
        %v984 = vunpack.c.l.b16 %v451
        %v985 = vunpack.c.h.b16 %v451
        %v986 = vunpack.c.l.b16 %v452
        %v987 = vunpack.c.h.b16 %v452
        %v988 = vunpack.c.l.b16 %v453
        %v989 = vunpack.c.h.b16 %v453
        %v990 = vunpack.c.l.b16 %v454
        %v991 = vunpack.c.h.b16 %v454
        %v992 = vunpack.c.l.b16 %v455
        %v993 = vunpack.c.h.b16 %v455
        %v994 = vunpack.c.l.b16 %v456
        %v995 = vunpack.c.h.b16 %v456
        %v996 = vunpack.c.l.b16 %v457
        %v997 = vunpack.c.h.b16 %v457
        %v998 = vunpack.c.l.b16 %v458
        %v999 = vunpack.c.h.b16 %v458
        %v1000 = vunpack.c.l.b16 %v459
        %v1001 = vunpack.c.h.b16 %v459
        %v1002 = vunpack.c.l.b16 %v460
        %v1003 = vunpack.c.h.b16 %v460
        %v1004 = vunpack.c.l.b16 %v461
        %v1005 = vunpack.c.h.b16 %v461
        %v1006 = vunpack.c.l.b16 %v462
        %v1007 = vunpack.c.h.b16 %v462
        %v1008 = vunpack.c.l.b16 %v463
        %v1009 = vunpack.c.h.b16 %v463
        %v1010 = vunpack.c.l.b16 %v464
        %v1011 = vunpack.c.h.b16 %v464
        %v1012 = vunpack.c.l.b16 %v465
        %v1013 = vunpack.c.h.b16 %v465
        %v1014 = vunpack.c.l.b16 %v466
        %v1015 = vunpack.c.h.b16 %v466
        %v1016 = vunpack.c.l.b16 %v467
        %v1017 = vunpack.c.h.b16 %v467
        %v1018 = vunpack.c.l.b16 %v468
        %v1019 = vunpack.c.h.b16 %v468
        %v1020 = vunpack.c.l.b16 %v469
        %v1021 = vunpack.c.h.b16 %v469
        %v1022 = vunpack.c.l.b16 %v470
        %v1023 = vunpack.c.h.b16 %v470
        %v1024 = vunpack.c.l.b16 %v471
        %v1025 = vunpack.c.h.b16 %v471
        %v1026 = vunpack.c.l.b16 %v472
        %v1027 = vunpack.c.h.b16 %v472
        %v1028 = vunpack.c.l.b16 %v473
        %v1029 = vunpack.c.h.b16 %v473
        %v1030 = vunpack.c.l.b16 %v474
        %v1031 = vunpack.c.h.b16 %v474
        %v1032 = vunpack.c.l.b16 %v475
        %v1033 = vunpack.c.h.b16 %v475
        %v1034 = vunpack.c.l.b16 %v476
        %v1035 = vunpack.c.h.b16 %v476
        %v1036 = vunpack.c.l.b16 %v477
        %v1037 = vunpack.c.h.b16 %v477
        %v1038 = vunpack.c.l.b16 %v478
        %v1039 = vunpack.c.h.b16 %v478
        %v1040 = vunpack.c.l.b16 %v479
        %v1041 = vunpack.c.h.b16 %v479
        %v1042 = vunpack.c.l.b16 %v480
        %v1043 = vunpack.c.h.b16 %v480
        %v1044 = vunpack.c.l.b16 %v481
        %v1045 = vunpack.c.h.b16 %v481
        %v1046 = vunpack.c.l.b16 %v482
        %v1047 = vunpack.c.h.b16 %v482
        %v1048 = vunpack.c.l.b16 %v483
        %v1049 = vunpack.c.h.b16 %v483
        %v1050 = vunpack.c.l.b16 %v484
        %v1051 = vunpack.c.h.b16 %v484
        %v1052 = vunpack.c.l.b16 %v485
        %v1053 = vunpack.c.h.b16 %v485
        %v1054 = vunpack.c.l.b16 %v486
        %v1055 = vunpack.c.h.b16 %v486
        %v1056 = vunpack.c.l.b16 %v487
        %v1057 = vunpack.c.h.b16 %v487
        %v1058 = vunpack.c.l.b16 %v488
        %v1059 = vunpack.c.h.b16 %v488
        %v1060 = vunpack.c.l.b16 %v489
        %v1061 = vunpack.c.h.b16 %v489
        %v1062 = vunpack.c.l.b16 %v490
        %v1063 = vunpack.c.h.b16 %v490
        %v1064 = vunpack.c.l.b16 %v491
        %v1065 = vunpack.c.h.b16 %v491
        %v1066 = vunpack.c.l.b16 %v492
        %v1067 = vunpack.c.h.b16 %v492
        %v1068 = vunpack.c.l.b16 %v493
        %v1069 = vunpack.c.h.b16 %v493
        %v1070 = vpack.c.b16 %v690, %v686
        %v1071 = vpack.c.b16 %v691, %v687
        %v1072 = vpack.c.b16 %v692, %v688
        %v1073 = vpack.c.b16 %v693, %v689
        %v1074 = vpack.c.b16 %v698, %v694
        %v1075 = vpack.c.b16 %v699, %v695
        %v1076 = vpack.c.b16 %v700, %v696
        %v1077 = vpack.c.b16 %v701, %v697
        %v1078 = vpack.c.b16 %v706, %v702
        %v1079 = vpack.c.b16 %v707, %v703
        %v1080 = vpack.c.b16 %v708, %v704
        %v1081 = vpack.c.b16 %v709, %v705
        %v1082 = vpack.c.b16 %v714, %v710
        %v1083 = vpack.c.b16 %v715, %v711
        %v1084 = vpack.c.b16 %v716, %v712
        %v1085 = vpack.c.b16 %v717, %v713
        %v1086 = vpack.c.b16 %v722, %v718
        %v1087 = vpack.c.b16 %v723, %v719
        %v1088 = vpack.c.b16 %v724, %v720
        %v1089 = vpack.c.b16 %v725, %v721
        %v1090 = vpack.c.b16 %v730, %v726
        %v1091 = vpack.c.b16 %v731, %v727
        %v1092 = vpack.c.b16 %v732, %v728
        %v1093 = vpack.c.b16 %v733, %v729
        %v1094 = vpack.c.b16 %v738, %v734
        %v1095 = vpack.c.b16 %v739, %v735
        %v1096 = vpack.c.b16 %v740, %v736
        %v1097 = vpack.c.b16 %v741, %v737
        %v1098 = vpack.c.b16 %v746, %v742
        %v1099 = vpack.c.b16 %v747, %v743
        %v1100 = vpack.c.b16 %v748, %v744
        %v1101 = vpack.c.b16 %v749, %v745
        %v1102 = vpack.c.b16 %v754, %v750
        %v1103 = vpack.c.b16 %v755, %v751
        %v1104 = vpack.c.b16 %v756, %v752
        %v1105 = vpack.c.b16 %v757, %v753
        %v1106 = vpack.c.b16 %v762, %v758
        %v1107 = vpack.c.b16 %v763, %v759
        %v1108 = vpack.c.b16 %v764, %v760
        %v1109 = vpack.c.b16 %v765, %v761
        %v1110 = vpack.c.b16 %v770, %v766
        %v1111 = vpack.c.b16 %v771, %v767
        %v1112 = vpack.c.b16 %v772, %v768
        %v1113 = vpack.c.b16 %v773, %v769
        %v1114 = vpack.c.b16 %v778, %v774
        %v1115 = vpack.c.b16 %v779, %v775
        %v1116 = vpack.c.b16 %v780, %v776
        %v1117 = vpack.c.b16 %v781, %v777
        %v1118 = vpack.c.b16 %v786, %v782
        %v1119 = vpack.c.b16 %v787, %v783
        %v1120 = vpack.c.b16 %v788, %v784
        %v1121 = vpack.c.b16 %v789, %v785
        %v1122 = vpack.c.b16 %v794, %v790
        %v1123 = vpack.c.b16 %v795, %v791
        %v1124 = vpack.c.b16 %v796, %v792
        %v1125 = vpack.c.b16 %v797, %v793
        %v1126 = vpack.c.b16 %v802, %v798
        %v1127 = vpack.c.b16 %v803, %v799
        %v1128 = vpack.c.b16 %v804, %v800
        %v1129 = vpack.c.b16 %v805, %v801
        %v1130 = vpack.c.b16 %v810, %v806
        %v1131 = vpack.c.b16 %v811, %v807
        %v1132 = vpack.c.b16 %v812, %v808
        %v1133 = vpack.c.b16 %v813, %v809
        %v1134 = vpack.c.b16 %v818, %v814
        %v1135 = vpack.c.b16 %v819, %v815
        %v1136 = vpack.c.b16 %v820, %v816
        %v1137 = vpack.c.b16 %v821, %v817
        %v1138 = vpack.c.b16 %v826, %v822
        %v1139 = vpack.c.b16 %v827, %v823
        %v1140 = vpack.c.b16 %v828, %v824
        %v1141 = vpack.c.b16 %v829, %v825
        %v1142 = vpack.c.b16 %v834, %v830
        %v1143 = vpack.c.b16 %v835, %v831
        %v1144 = vpack.c.b16 %v836, %v832
        %v1145 = vpack.c.b16 %v837, %v833
        %v1146 = vpack.c.b16 %v842, %v838
        %v1147 = vpack.c.b16 %v843, %v839
        %v1148 = vpack.c.b16 %v844, %v840
        %v1149 = vpack.c.b16 %v845, %v841
        %v1150 = vpack.c.b16 %v850, %v846
        %v1151 = vpack.c.b16 %v851, %v847
        %v1152 = vpack.c.b16 %v852, %v848
        %v1153 = vpack.c.b16 %v853, %v849
        %v1154 = vpack.c.b16 %v858, %v854
        %v1155 = vpack.c.b16 %v859, %v855
        %v1156 = vpack.c.b16 %v860, %v856
        %v1157 = vpack.c.b16 %v861, %v857
        %v1158 = vpack.c.b16 %v866, %v862
        %v1159 = vpack.c.b16 %v867, %v863
        %v1160 = vpack.c.b16 %v868, %v864
        %v1161 = vpack.c.b16 %v869, %v865
        %v1162 = vpack.c.b16 %v874, %v870
        %v1163 = vpack.c.b16 %v875, %v871
        %v1164 = vpack.c.b16 %v876, %v872
        %v1165 = vpack.c.b16 %v877, %v873
        %v1166 = vpack.c.b16 %v882, %v878
        %v1167 = vpack.c.b16 %v883, %v879
        %v1168 = vpack.c.b16 %v884, %v880
        %v1169 = vpack.c.b16 %v885, %v881
        %v1170 = vpack.c.b16 %v890, %v886
        %v1171 = vpack.c.b16 %v891, %v887
        %v1172 = vpack.c.b16 %v892, %v888
        %v1173 = vpack.c.b16 %v893, %v889
        %v1174 = vpack.c.b16 %v898, %v894
        %v1175 = vpack.c.b16 %v899, %v895
        %v1176 = vpack.c.b16 %v900, %v896
        %v1177 = vpack.c.b16 %v901, %v897
        %v1178 = vpack.c.b16 %v906, %v902
        %v1179 = vpack.c.b16 %v907, %v903
        %v1180 = vpack.c.b16 %v908, %v904
        %v1181 = vpack.c.b16 %v909, %v905
        %v1182 = vpack.c.b16 %v914, %v910
        %v1183 = vpack.c.b16 %v915, %v911
        %v1184 = vpack.c.b16 %v916, %v912
        %v1185 = vpack.c.b16 %v917, %v913
        %v1186 = vpack.c.b16 %v922, %v918
        %v1187 = vpack.c.b16 %v923, %v919
        %v1188 = vpack.c.b16 %v924, %v920
        %v1189 = vpack.c.b16 %v925, %v921
        %v1190 = vpack.c.b16 %v930, %v926
        %v1191 = vpack.c.b16 %v931, %v927
        %v1192 = vpack.c.b16 %v932, %v928
        %v1193 = vpack.c.b16 %v933, %v929
        %v1194 = vpack.c.b16 %v938, %v934
        %v1195 = vpack.c.b16 %v939, %v935
        %v1196 = vpack.c.b16 %v940, %v936
        %v1197 = vpack.c.b16 %v941, %v937
        %v1198 = vpack.c.b16 %v946, %v942
        %v1199 = vpack.c.b16 %v947, %v943
        %v1200 = vpack.c.b16 %v948, %v944
        %v1201 = vpack.c.b16 %v949, %v945
        %v1202 = vpack.c.b16 %v954, %v950
        %v1203 = vpack.c.b16 %v955, %v951
        %v1204 = vpack.c.b16 %v956, %v952
        %v1205 = vpack.c.b16 %v957, %v953
        %v1206 = vpack.c.b16 %v962, %v958
        %v1207 = vpack.c.b16 %v963, %v959
        %v1208 = vpack.c.b16 %v964, %v960
        %v1209 = vpack.c.b16 %v965, %v961
        %v1210 = vpack.c.b16 %v970, %v966
        %v1211 = vpack.c.b16 %v971, %v967
        %v1212 = vpack.c.b16 %v972, %v968
        %v1213 = vpack.c.b16 %v973, %v969
        %v1214 = vpack.c.b16 %v978, %v974
        %v1215 = vpack.c.b16 %v979, %v975
        %v1216 = vpack.c.b16 %v980, %v976
        %v1217 = vpack.c.b16 %v981, %v977
        %v1218 = vpack.c.b16 %v986, %v982
        %v1219 = vpack.c.b16 %v987, %v983
        %v1220 = vpack.c.b16 %v988, %v984
        %v1221 = vpack.c.b16 %v989, %v985
        %v1222 = vpack.c.b16 %v994, %v990
        %v1223 = vpack.c.b16 %v995, %v991
        %v1224 = vpack.c.b16 %v996, %v992
        %v1225 = vpack.c.b16 %v997, %v993
        %v1226 = vpack.c.b16 %v1002, %v998
        %v1227 = vpack.c.b16 %v1003, %v999
        %v1228 = vpack.c.b16 %v1004, %v1000
        %v1229 = vpack.c.b16 %v1005, %v1001
        %v1230 = vpack.c.b16 %v1010, %v1006
        %v1231 = vpack.c.b16 %v1011, %v1007
        %v1232 = vpack.c.b16 %v1012, %v1008
        %v1233 = vpack.c.b16 %v1013, %v1009
        %v1234 = vpack.c.b16 %v1018, %v1014
        %v1235 = vpack.c.b16 %v1019, %v1015
        %v1236 = vpack.c.b16 %v1020, %v1016
        %v1237 = vpack.c.b16 %v1021, %v1017
        %v1238 = vpack.c.b16 %v1026, %v1022
        %v1239 = vpack.c.b16 %v1027, %v1023
        %v1240 = vpack.c.b16 %v1028, %v1024
        %v1241 = vpack.c.b16 %v1029, %v1025
        %v1242 = vpack.c.b16 %v1034, %v1030
        %v1243 = vpack.c.b16 %v1035, %v1031
        %v1244 = vpack.c.b16 %v1036, %v1032
        %v1245 = vpack.c.b16 %v1037, %v1033
        %v1246 = vpack.c.b16 %v1042, %v1038
        %v1247 = vpack.c.b16 %v1043, %v1039
        %v1248 = vpack.c.b16 %v1044, %v1040
        %v1249 = vpack.c.b16 %v1045, %v1041
        %v1250 = vpack.c.b16 %v1050, %v1046
        %v1251 = vpack.c.b16 %v1051, %v1047
        %v1252 = vpack.c.b16 %v1052, %v1048
        %v1253 = vpack.c.b16 %v1053, %v1049
        %v1254 = vpack.c.b16 %v1058, %v1054
        %v1255 = vpack.c.b16 %v1059, %v1055
        %v1256 = vpack.c.b16 %v1060, %v1056
        %v1257 = vpack.c.b16 %v1061, %v1057
        %v1258 = vpack.c.b16 %v1066, %v1062
        %v1259 = vpack.c.b16 %v1067, %v1063
        %v1260 = vpack.c.b16 %v1068, %v1064
        %v1261 = vpack.c.b16 %v1069, %v1065
        %1454 = vmatprep.subr.bf16.mxu0 %v1099
        %1455 = vmatpush1.bf16.msra.mxu0 %v1098
        %1456 = vmatprep.subr.bf16.mxu0 %v1095
        %1457 = vmatpush1.bf16.msra.mxu0 %v1094
        %1458 = vmatprep.subr.bf16.mxu0 %v1091
        %1459 = vmatpush1.bf16.msra.mxu0 %v1090
        %1460 = vmatprep.subr.bf16.mxu0 %v1087
        %1461 = vmatpush1.bf16.msra.mxu0 %v1086
        %1462 = vmatprep.subr.bf16.mxu0 %v1083
        %1463 = vmatpush1.bf16.msra.mxu0 %v1082
        %1464 = vmatprep.subr.bf16.mxu0 %v1079
        %1465 = vmatpush1.bf16.msra.mxu0 %v1078
        %1466 = vmatprep.subr.bf16.mxu0 %v1075
        %1467 = vmatpush1.bf16.msra.mxu0 %v1074
        %1468 = vmatprep.subr.bf16.mxu0 %v1071
        %1469 = vmatpush1.bf16.msra.mxu0 %v1070
        %1470 = vmatprep.subr.bf16.mxu0 %v1131
        %1471 = vmatpush2.bf16.msra.mxu0 %v1130
        %1472 = vmatprep.subr.bf16.mxu0 %v1127
        %1473 = vmatpush2.bf16.msra.mxu0 %v1126
        %1474 = vmatprep.subr.bf16.mxu0 %v1123
        %1475 = vmatpush2.bf16.msra.mxu0 %v1122
        %1476 = vmatprep.subr.bf16.mxu0 %v1119
        %1477 = vmatpush2.bf16.msra.mxu0 %v1118
        %1478 = vmatprep.subr.bf16.mxu0 %v1115
        %1479 = vmatpush2.bf16.msra.mxu0 %v1114
        %1480 = vmatprep.subr.bf16.mxu0 %v1111
        %1481 = vmatpush2.bf16.msra.mxu0 %v1110
        %1482 = vmatprep.subr.bf16.mxu0 %v1107
        %1483 = vmatpush2.bf16.msra.mxu0 %v1106
        %1484 = vmatprep.subr.bf16.mxu0 %v1103
        %1485 = vmatpush2.bf16.msra.mxu0 %v1102
        %1486 = vmatprep.mubr.bf16.mxu0 %v297
        %1487 = vmatmul.mubr.bf16.gmra.mxu0 %v296
        %v1488 = vpop.f32.mrf.mxu0
        %v1489 = vadd.f32 0.0, %v1488
        %v1490 = vpop.f32.mrf.mxu0
        %v1491 = vadd.f32 0.0, %v1490
        %v1492 = vpop.f32.mrf.mxu0
        %v1493 = vpop.f32.mrf.mxu0
        %1494 = vdwg.mxu0
        %1495 = vmatprep.subr.bf16.mxu0 %v1163
        %1496 = vmatpush1.bf16.msra.mxu0 %v1162
        %1497 = vmatprep.subr.bf16.mxu0 %v1159
        %1498 = vmatpush1.bf16.msra.mxu0 %v1158
        %1499 = vmatprep.subr.bf16.mxu0 %v1155
        %1500 = vmatpush1.bf16.msra.mxu0 %v1154
        %1501 = vmatprep.subr.bf16.mxu0 %v1151
        %1502 = vmatpush1.bf16.msra.mxu0 %v1150
        %1503 = vmatprep.subr.bf16.mxu0 %v1147
        %1504 = vmatpush1.bf16.msra.mxu0 %v1146
        %1505 = vmatprep.subr.bf16.mxu0 %v1143
        %1506 = vmatpush1.bf16.msra.mxu0 %v1142
        %1507 = vmatprep.subr.bf16.mxu0 %v1139
        %1508 = vmatpush1.bf16.msra.mxu0 %v1138
        %1509 = vmatprep.subr.bf16.mxu0 %v1135
        %1510 = vmatpush1.bf16.msra.mxu0 %v1134
        %1511 = vmatprep.subr.bf16.mxu0 %v1195
        %1512 = vmatpush2.bf16.msra.mxu0 %v1194
        %1513 = vmatprep.subr.bf16.mxu0 %v1191
        %1514 = vmatpush2.bf16.msra.mxu0 %v1190
        %1515 = vmatprep.subr.bf16.mxu0 %v1187
        %1516 = vmatpush2.bf16.msra.mxu0 %v1186
        %1517 = vmatprep.subr.bf16.mxu0 %v1183
        %1518 = vmatpush2.bf16.msra.mxu0 %v1182
        %1519 = vmatprep.subr.bf16.mxu0 %v1179
        %1520 = vmatpush2.bf16.msra.mxu0 %v1178
        %1521 = vmatprep.subr.bf16.mxu0 %v1175
        %1522 = vmatpush2.bf16.msra.mxu0 %v1174
        %1523 = vmatprep.subr.bf16.mxu0 %v1171
        %1524 = vmatpush2.bf16.msra.mxu0 %v1170
        %1525 = vmatprep.subr.bf16.mxu0 %v1167
        %1526 = vmatpush2.bf16.msra.mxu0 %v1166
        %1527 = vmatprep.mubr.bf16.mxu0 %v299
        %1528 = vmatmul.mubr.bf16.gmra.mxu0 %v298
        %v1529 = vpop.f32.mrf.mxu0
        %v1530 = vadd.f32 %v1489, %v1529
        %v1531 = vpop.f32.mrf.mxu0
        %v1532 = vadd.f32 %v1491, %v1531
        %v1533 = vpop.f32.mrf.mxu0
        %v1534 = vpop.f32.mrf.mxu0
        %1535 = vdwg.mxu0
        %1536 = vmatprep.subr.bf16.mxu0 %v1227
        %1537 = vmatpush1.bf16.msra.mxu0 %v1226
        %1538 = vmatprep.subr.bf16.mxu0 %v1223
        %1539 = vmatpush1.bf16.msra.mxu0 %v1222
        %1540 = vmatprep.subr.bf16.mxu0 %v1219
        %1541 = vmatpush1.bf16.msra.mxu0 %v1218
        %1542 = vmatprep.subr.bf16.mxu0 %v1215
        %1543 = vmatpush1.bf16.msra.mxu0 %v1214
        %1544 = vmatprep.subr.bf16.mxu0 %v1211
        %1545 = vmatpush1.bf16.msra.mxu0 %v1210
        %1546 = vmatprep.subr.bf16.mxu0 %v1207
        %1547 = vmatpush1.bf16.msra.mxu0 %v1206
        %1548 = vmatprep.subr.bf16.mxu0 %v1203
        %1549 = vmatpush1.bf16.msra.mxu0 %v1202
        %1550 = vmatprep.subr.bf16.mxu0 %v1199
        %1551 = vmatpush1.bf16.msra.mxu0 %v1198
        %1552 = vmatprep.subr.bf16.mxu0 %v1259
        %1553 = vmatpush2.bf16.msra.mxu0 %v1258
        %1554 = vmatprep.subr.bf16.mxu0 %v1255
        %1555 = vmatpush2.bf16.msra.mxu0 %v1254
        %1556 = vmatprep.subr.bf16.mxu0 %v1251
        %1557 = vmatpush2.bf16.msra.mxu0 %v1250
        %1558 = vmatprep.subr.bf16.mxu0 %v1247
        %1559 = vmatpush2.bf16.msra.mxu0 %v1246
        %1560 = vmatprep.subr.bf16.mxu0 %v1243
        %1561 = vmatpush2.bf16.msra.mxu0 %v1242
        %1562 = vmatprep.subr.bf16.mxu0 %v1239
        %1563 = vmatpush2.bf16.msra.mxu0 %v1238
        %1564 = vmatprep.subr.bf16.mxu0 %v1235
        %1565 = vmatpush2.bf16.msra.mxu0 %v1234
        %1566 = vmatprep.subr.bf16.mxu0 %v1231
        %1567 = vmatpush2.bf16.msra.mxu0 %v1230
        %1568 = vmatprep.mubr.bf16.mxu0 %v301
        %1569 = vmatmul.mubr.bf16.gmra.mxu0 %v300
        %v1570 = vpop.f32.mrf.mxu0
        %v1571 = vadd.f32 %v1530, %v1570
        %v1572 = vpop.f32.mrf.mxu0
        %v1573 = vadd.f32 %v1532, %v1572
        %v1574 = vpop.f32.mrf.mxu0
        %v1575 = vpop.f32.mrf.mxu0
        %1576 = vdwg.mxu0
        %1577 = vmatprep.subr.bf16.mxu0 %v1101
        %1578 = vmatpush1.bf16.msra.mxu0 %v1100
        %1579 = vmatprep.subr.bf16.mxu0 %v1097
        %1580 = vmatpush1.bf16.msra.mxu0 %v1096
        %1581 = vmatprep.subr.bf16.mxu0 %v1093
        %1582 = vmatpush1.bf16.msra.mxu0 %v1092
        %1583 = vmatprep.subr.bf16.mxu0 %v1089
        %1584 = vmatpush1.bf16.msra.mxu0 %v1088
        %1585 = vmatprep.subr.bf16.mxu0 %v1085
        %1586 = vmatpush1.bf16.msra.mxu0 %v1084
        %1587 = vmatprep.subr.bf16.mxu0 %v1081
        %1588 = vmatpush1.bf16.msra.mxu0 %v1080
        %1589 = vmatprep.subr.bf16.mxu0 %v1077
        %1590 = vmatpush1.bf16.msra.mxu0 %v1076
        %1591 = vmatprep.subr.bf16.mxu0 %v1073
        %1592 = vmatpush1.bf16.msra.mxu0 %v1072
        %1593 = vmatprep.subr.bf16.mxu0 %v1133
        %1594 = vmatpush2.bf16.msra.mxu0 %v1132
        %1595 = vmatprep.subr.bf16.mxu0 %v1129
        %1596 = vmatpush2.bf16.msra.mxu0 %v1128
        %1597 = vmatprep.subr.bf16.mxu0 %v1125
        %1598 = vmatpush2.bf16.msra.mxu0 %v1124
        %1599 = vmatprep.subr.bf16.mxu0 %v1121
        %1600 = vmatpush2.bf16.msra.mxu0 %v1120
        %1601 = vmatprep.subr.bf16.mxu0 %v1117
        %1602 = vmatpush2.bf16.msra.mxu0 %v1116
        %1603 = vmatprep.subr.bf16.mxu0 %v1113
        %1604 = vmatpush2.bf16.msra.mxu0 %v1112
        %1605 = vmatprep.subr.bf16.mxu0 %v1109
        %1606 = vmatpush2.bf16.msra.mxu0 %v1108
        %1607 = vmatprep.subr.bf16.mxu0 %v1105
        %1608 = vmatpush2.bf16.msra.mxu0 %v1104
        %1609 = vmatprep.mubr.bf16.mxu0 %v297
        %1610 = vmatmul.mubr.bf16.gmra.mxu0 %v296
        %v1611 = vpop.f32.mrf.mxu0
        %v1612 = vadd.f32 0.0, %v1611
        %v1613 = vpop.f32.mrf.mxu0
        %v1614 = vadd.f32 0.0, %v1613
        %v1615 = vpop.f32.mrf.mxu0
        %v1616 = vpop.f32.mrf.mxu0
        %1617 = vdwg.mxu0
        %1618 = vmatprep.subr.bf16.mxu0 %v1165
        %1619 = vmatpush1.bf16.msra.mxu0 %v1164
        %1620 = vmatprep.subr.bf16.mxu0 %v1161
        %1621 = vmatpush1.bf16.msra.mxu0 %v1160
        %1622 = vmatprep.subr.bf16.mxu0 %v1157
        %1623 = vmatpush1.bf16.msra.mxu0 %v1156
        %1624 = vmatprep.subr.bf16.mxu0 %v1153
        %1625 = vmatpush1.bf16.msra.mxu0 %v1152
        %1626 = vmatprep.subr.bf16.mxu0 %v1149
        %1627 = vmatpush1.bf16.msra.mxu0 %v1148
        %1628 = vmatprep.subr.bf16.mxu0 %v1145
        %1629 = vmatpush1.bf16.msra.mxu0 %v1144
        %1630 = vmatprep.subr.bf16.mxu0 %v1141
        %1631 = vmatpush1.bf16.msra.mxu0 %v1140
        %1632 = vmatprep.subr.bf16.mxu0 %v1137
        %1633 = vmatpush1.bf16.msra.mxu0 %v1136
        %1634 = vmatprep.subr.bf16.mxu0 %v1197
        %1635 = vmatpush2.bf16.msra.mxu0 %v1196
        %1636 = vmatprep.subr.bf16.mxu0 %v1193
        %1637 = vmatpush2.bf16.msra.mxu0 %v1192
        %1638 = vmatprep.subr.bf16.mxu0 %v1189
        %1639 = vmatpush2.bf16.msra.mxu0 %v1188
        %1640 = vmatprep.subr.bf16.mxu0 %v1185
        %1641 = vmatpush2.bf16.msra.mxu0 %v1184
        %1642 = vmatprep.subr.bf16.mxu0 %v1181
        %1643 = vmatpush2.bf16.msra.mxu0 %v1180
        %1644 = vmatprep.subr.bf16.mxu0 %v1177
        %1645 = vmatpush2.bf16.msra.mxu0 %v1176
        %1646 = vmatprep.subr.bf16.mxu0 %v1173
        %1647 = vmatpush2.bf16.msra.mxu0 %v1172
        %1648 = vmatprep.subr.bf16.mxu0 %v1169
        %1649 = vmatpush2.bf16.msra.mxu0 %v1168
        %1650 = vmatprep.mubr.bf16.mxu0 %v299
        %1651 = vmatmul.mubr.bf16.gmra.mxu0 %v298
        %v1652 = vpop.f32.mrf.mxu0
        %v1653 = vadd.f32 %v1612, %v1652
        %v1654 = vpop.f32.mrf.mxu0
        %v1655 = vadd.f32 %v1614, %v1654
        %v1656 = vpop.f32.mrf.mxu0
        %v1657 = vpop.f32.mrf.mxu0
        %1658 = vdwg.mxu0
        %1659 = vmatprep.subr.bf16.mxu0 %v1229
        %1660 = vmatpush1.bf16.msra.mxu0 %v1228
        %1661 = vmatprep.subr.bf16.mxu0 %v1225
        %1662 = vmatpush1.bf16.msra.mxu0 %v1224
        %1663 = vmatprep.subr.bf16.mxu0 %v1221
        %1664 = vmatpush1.bf16.msra.mxu0 %v1220
        %1665 = vmatprep.subr.bf16.mxu0 %v1217
        %1666 = vmatpush1.bf16.msra.mxu0 %v1216
        %1667 = vmatprep.subr.bf16.mxu0 %v1213
        %1668 = vmatpush1.bf16.msra.mxu0 %v1212
        %1669 = vmatprep.subr.bf16.mxu0 %v1209
        %1670 = vmatpush1.bf16.msra.mxu0 %v1208
        %1671 = vmatprep.subr.bf16.mxu0 %v1205
        %1672 = vmatpush1.bf16.msra.mxu0 %v1204
        %1673 = vmatprep.subr.bf16.mxu0 %v1201
        %1674 = vmatpush1.bf16.msra.mxu0 %v1200
        %1675 = vmatprep.subr.bf16.mxu0 %v1261
        %1676 = vmatpush2.bf16.msra.mxu0 %v1260
        %1677 = vmatprep.subr.bf16.mxu0 %v1257
        %1678 = vmatpush2.bf16.msra.mxu0 %v1256
        %1679 = vmatprep.subr.bf16.mxu0 %v1253
        %1680 = vmatpush2.bf16.msra.mxu0 %v1252
        %1681 = vmatprep.subr.bf16.mxu0 %v1249
        %1682 = vmatpush2.bf16.msra.mxu0 %v1248
        %1683 = vmatprep.subr.bf16.mxu0 %v1245
        %1684 = vmatpush2.bf16.msra.mxu0 %v1244
        %1685 = vmatprep.subr.bf16.mxu0 %v1241
        %1686 = vmatpush2.bf16.msra.mxu0 %v1240
        %1687 = vmatprep.subr.bf16.mxu0 %v1237
        %1688 = vmatpush2.bf16.msra.mxu0 %v1236
        %1689 = vmatprep.subr.bf16.mxu0 %v1233
        %1690 = vmatpush2.bf16.msra.mxu0 %v1232
        %1691 = vmatprep.mubr.bf16.mxu0 %v301
        %1692 = vmatmul.mubr.bf16.gmra.mxu0 %v300
        %v1693 = vpop.f32.mrf.mxu0
        %v1694 = vadd.f32 %v1653, %v1693
        %v1695 = vpop.f32.mrf.mxu0
        %v1696 = vadd.f32 %v1655, %v1695
        %v1697 = vpop.f32.mrf.mxu0
        %v1698 = vpop.f32.mrf.mxu0
        %1699 = vdwg.mxu0
        %v1700 = vmax.f32 %v1571, 0.0
        %v1701 = vmax.f32 %v1573, 0.0
        %v1702 = vmax.f32 %v1694, 0.0
        %v1703 = vmax.f32 %v1696, 0.0
        %v1704 = vld [vmem:[%s0] sm:$0x3]
        %vm1705 = vcmask 64512
        %v1707 = vsel %vm1705, %v1704, 0
        %1709 = vmatprep.subr.mxu0 0.0
        %1710 = vmatpush1.msra.mxu0 0.0
        %1711 = vmatprep.subr.mxu0 0.0
        %1712 = vmatpush1.msra.mxu0 0.0
        %1713 = vmatprep.subr.mxu0 0.0
        %1714 = vmatpush1.msra.mxu0 0.0
        %1715 = vmatprep.subr.mxu0 0.0
        %1716 = vmatpush1.msra.mxu0 0.0
        %1717 = vmatprep.subr.mxu0 0.0
        %1718 = vmatpush1.msra.mxu0 0.0
        %1719 = vmatprep.subr.mxu0 0.0
        %1720 = vmatpush1.msra.mxu0 0.0
        %1721 = vmatprep.subr.mxu0 0.0
        %1722 = vmatpush1.msra.mxu0 0.0
        %1723 = vmatprep.subr.mxu0 0.0
        %1724 = vmatpush1.msra.mxu0 0.0
        %1725 = vmatprep.subr.mxu0 0.0
        %1726 = vmatpush1.msra.mxu0 0.0
        %1727 = vmatprep.subr.mxu0 0.0
        %1728 = vmatpush1.msra.mxu0 0.0
        %1729 = vmatprep.subr.mxu0 0.0
        %1730 = vmatpush1.msra.mxu0 0.0
        %1731 = vmatprep.subr.mxu0 0.0
        %1732 = vmatpush1.msra.mxu0 0.0
        %1733 = vmatprep.subr.mxu0 0.0
        %1734 = vmatpush1.msra.mxu0 0.0
        %1735 = vmatprep.subr.mxu0 0.0
        %1736 = vmatpush1.msra.mxu0 0.0
        %1737 = vmatprep.subr.mxu0 0.0
        %1738 = vmatpush1.msra.mxu0 0.0
        %1739 = vmatprep.subr.mxu0 %v1701
        %1740 = vmatpush1.msra.mxu0 %v1700
        %1741 = vmatprep.subr.mxu0 0.0
        %1742 = vmatpush2.msra.mxu0 0.0
        %1743 = vmatprep.subr.mxu0 0.0
        %1744 = vmatpush2.msra.mxu0 0.0
        %1745 = vmatprep.subr.mxu0 0.0
        %1746 = vmatpush2.msra.mxu0 0.0
        %1747 = vmatprep.subr.mxu0 0.0
        %1748 = vmatpush2.msra.mxu0 0.0
        %1749 = vmatprep.subr.mxu0 0.0
        %1750 = vmatpush2.msra.mxu0 0.0
        %1751 = vmatprep.subr.mxu0 0.0
        %1752 = vmatpush2.msra.mxu0 0.0
        %1753 = vmatprep.subr.mxu0 0.0
        %1754 = vmatpush2.msra.mxu0 0.0
        %1755 = vmatprep.subr.mxu0 0.0
        %1756 = vmatpush2.msra.mxu0 0.0
        %1757 = vmatprep.subr.mxu0 0.0
        %1758 = vmatpush2.msra.mxu0 0.0
        %1759 = vmatprep.subr.mxu0 0.0
        %1760 = vmatpush2.msra.mxu0 0.0
        %1761 = vmatprep.subr.mxu0 0.0
        %1762 = vmatpush2.msra.mxu0 0.0
        %1763 = vmatprep.subr.mxu0 0.0
        %1764 = vmatpush2.msra.mxu0 0.0
        %1765 = vmatprep.subr.mxu0 0.0
        %1766 = vmatpush2.msra.mxu0 0.0
        %1767 = vmatprep.subr.mxu0 0.0
        %1768 = vmatpush2.msra.mxu0 0.0
        %1769 = vmatprep.subr.mxu0 0.0
        %1770 = vmatpush2.msra.mxu0 0.0
        %1771 = vmatprep.subr.mxu0 0.0
        %1772 = vmatpush2.msra.mxu0 0.0
        %1773 = vmatprep.mubr.f32.mxu0 0.0
        %1774 = vmatmul.mubr.f32.gmra.mxu0 %v1707
        %v1775 = vpop.f32.mrf.mxu0
        %v1776 = vadd.f32 0.0, %v1775
        %v1777 = vpop.f32.mrf.mxu0
        %v1778 = vadd.f32 0.0, %v1777
        %1779 = vdwg.mxu0
        %1780 = vmatprep.subr.mxu0 0.0
        %1781 = vmatpush1.msra.mxu0 0.0
        %1782 = vmatprep.subr.mxu0 0.0
        %1783 = vmatpush1.msra.mxu0 0.0
        %1784 = vmatprep.subr.mxu0 0.0
        %1785 = vmatpush1.msra.mxu0 0.0
        %1786 = vmatprep.subr.mxu0 0.0
        %1787 = vmatpush1.msra.mxu0 0.0
        %1788 = vmatprep.subr.mxu0 0.0
        %1789 = vmatpush1.msra.mxu0 0.0
        %1790 = vmatprep.subr.mxu0 0.0
        %1791 = vmatpush1.msra.mxu0 0.0
        %1792 = vmatprep.subr.mxu0 0.0
        %1793 = vmatpush1.msra.mxu0 0.0
        %1794 = vmatprep.subr.mxu0 0.0
        %1795 = vmatpush1.msra.mxu0 0.0
        %1796 = vmatprep.subr.mxu0 0.0
        %1797 = vmatpush1.msra.mxu0 0.0
        %1798 = vmatprep.subr.mxu0 0.0
        %1799 = vmatpush1.msra.mxu0 0.0
        %1800 = vmatprep.subr.mxu0 0.0
        %1801 = vmatpush1.msra.mxu0 0.0
        %1802 = vmatprep.subr.mxu0 0.0
        %1803 = vmatpush1.msra.mxu0 0.0
        %1804 = vmatprep.subr.mxu0 0.0
        %1805 = vmatpush1.msra.mxu0 0.0
        %1806 = vmatprep.subr.mxu0 0.0
        %1807 = vmatpush1.msra.mxu0 0.0
        %1808 = vmatprep.subr.mxu0 0.0
        %1809 = vmatpush1.msra.mxu0 0.0
        %1810 = vmatprep.subr.mxu0 %v1703
        %1811 = vmatpush1.msra.mxu0 %v1702
        %1812 = vmatprep.subr.mxu0 0.0
        %1813 = vmatpush2.msra.mxu0 0.0
        %1814 = vmatprep.subr.mxu0 0.0
        %1815 = vmatpush2.msra.mxu0 0.0
        %1816 = vmatprep.subr.mxu0 0.0
        %1817 = vmatpush2.msra.mxu0 0.0
        %1818 = vmatprep.subr.mxu0 0.0
        %1819 = vmatpush2.msra.mxu0 0.0
        %1820 = vmatprep.subr.mxu0 0.0
        %1821 = vmatpush2.msra.mxu0 0.0
        %1822 = vmatprep.subr.mxu0 0.0
        %1823 = vmatpush2.msra.mxu0 0.0
        %1824 = vmatprep.subr.mxu0 0.0
        %1825 = vmatpush2.msra.mxu0 0.0
        %1826 = vmatprep.subr.mxu0 0.0
        %1827 = vmatpush2.msra.mxu0 0.0
        %1828 = vmatprep.subr.mxu0 0.0
        %1829 = vmatpush2.msra.mxu0 0.0
        %1830 = vmatprep.subr.mxu0 0.0
        %1831 = vmatpush2.msra.mxu0 0.0
        %1832 = vmatprep.subr.mxu0 0.0
        %1833 = vmatpush2.msra.mxu0 0.0
        %1834 = vmatprep.subr.mxu0 0.0
        %1835 = vmatpush2.msra.mxu0 0.0
        %1836 = vmatprep.subr.mxu0 0.0
        %1837 = vmatpush2.msra.mxu0 0.0
        %1838 = vmatprep.subr.mxu0 0.0
        %1839 = vmatpush2.msra.mxu0 0.0
        %1840 = vmatprep.subr.mxu0 0.0
        %1841 = vmatpush2.msra.mxu0 0.0
        %1842 = vmatprep.subr.mxu0 0.0
        %1843 = vmatpush2.msra.mxu0 0.0
        %1844 = vmatprep.mubr.f32.mxu0 0.0
        %1845 = vmatmul.mubr.f32.gmra.mxu0 %v1707
        %v1846 = vpop.f32.mrf.mxu0
        %v1847 = vadd.f32 0.0, %v1846
        %v1848 = vpop.f32.mrf.mxu0
        %v1849 = vadd.f32 0.0, %v1848
        %1850 = vdwg.mxu0
        %v1851 = vld [vmem:[#allocation2] sm:$0x3]
        %v1852 = vld [vmem:[%s252] sm:$0xff]
        %v1853 = vld [vmem:[%s252 + $0x8] sm:$0xff]
        %v1854 = vld [vmem:[%s252 + $0x10] sm:$0xff]
        %v1855 = vld [vmem:[%s252 + $0x18] sm:$0xff]
        %v1856 = vld [vmem:[%s252 + $0x20] sm:$0xff]
        %v1857 = vld [vmem:[%s252 + $0x28] sm:$0xff]
        %v1858 = vld [vmem:[%s252 + $0x30] sm:$0xff]
        %v1859 = vld [vmem:[%s252 + $0x38] sm:$0xff]
        %v1860 = vld [vmem:[%s252 + $0x40] sm:$0xff]
        %v1861 = vld [vmem:[%s252 + $0x48] sm:$0xff]
        %v1862 = vld [vmem:[%s252 + $0x50] sm:$0xff]
        %v1863 = vld [vmem:[%s252 + $0x58] sm:$0xff]
        %v1864 = vld [vmem:[%s252 + $0x60] sm:$0xff]
        %v1865 = vld [vmem:[%s252 + $0x68] sm:$0xff]
        %v1866 = vld [vmem:[%s252 + $0x70] sm:$0xff]
        %v1867 = vld [vmem:[%s252 + $0x78] sm:$0xff]
        %v1868 = vld [vmem:[%s252 + $0x80] sm:$0xff]
        %v1869 = vld [vmem:[%s252 + $0x88] sm:$0xff]
        %v1870 = vld [vmem:[%s252 + $0x90] sm:$0xff]
        %v1871 = vld [vmem:[%s252 + $0x98] sm:$0xff]
        %v1872 = vld [vmem:[%s252 + $0xa0] sm:$0xff]
        %v1873 = vld [vmem:[%s252 + $0xa8] sm:$0xff]
        %v1874 = vld [vmem:[%s252 + $0xb0] sm:$0xff]
        %v1875 = vld [vmem:[%s252 + $0xb8] sm:$0xff]
        %v1876 = vld [vmem:[%s252 + $0xc0] sm:$0xff]
        %v1877 = vld [vmem:[%s252 + $0xc8] sm:$0xff]
        %v1878 = vld [vmem:[%s252 + $0xd0] sm:$0xff]
        %v1879 = vld [vmem:[%s252 + $0xd8] sm:$0xff]
        %v1880 = vld [vmem:[%s252 + $0xe0] sm:$0xff]
        %v1881 = vld [vmem:[%s252 + $0xe8] sm:$0xff]
        %v1882 = vld [vmem:[%s252 + $0xf0] sm:$0xff]
        %v1883 = vld [vmem:[%s252 + $0xf8] sm:$0xff]
        %v1884 = vld [vmem:[%s252 + $0x100] sm:$0xff]
        %v1885 = vld [vmem:[%s252 + $0x108] sm:$0xff]
        %v1886 = vld [vmem:[%s252 + $0x110] sm:$0xff]
        %v1887 = vld [vmem:[%s252 + $0x118] sm:$0xff]
        %v1888 = vld [vmem:[%s252 + $0x120] sm:$0xff]
        %v1889 = vld [vmem:[%s252 + $0x128] sm:$0xff]
        %v1890 = vld [vmem:[%s252 + $0x130] sm:$0xff]
        %v1891 = vld [vmem:[%s252 + $0x138] sm:$0xff]
        %v1892 = vld [vmem:[%s252 + $0x140] sm:$0xff]
        %v1893 = vld [vmem:[%s252 + $0x148] sm:$0xff]
        %v1894 = vld [vmem:[%s252 + $0x150] sm:$0xff]
        %v1895 = vld [vmem:[%s252 + $0x158] sm:$0xff]
        %v1896 = vld [vmem:[%s252 + $0x160] sm:$0xff]
        %v1897 = vld [vmem:[%s252 + $0x168] sm:$0xff]
        %v1898 = vld [vmem:[%s252 + $0x170] sm:$0xff]
        %v1899 = vld [vmem:[%s252 + $0x178] sm:$0xff]
        %v1900 = vld [vmem:[%s252 + $0x180] sm:$0xff]
        %v1901 = vld [vmem:[%s252 + $0x188] sm:$0xff]
        %v1902 = vld [vmem:[%s252 + $0x190] sm:$0xff]
        %v1903 = vld [vmem:[%s252 + $0x198] sm:$0xff]
        %v1904 = vld [vmem:[%s252 + $0x1a0] sm:$0xff]
        %v1905 = vld [vmem:[%s252 + $0x1a8] sm:$0xff]
        %v1906 = vld [vmem:[%s252 + $0x1b0] sm:$0xff]
        %v1907 = vld [vmem:[%s252 + $0x1b8] sm:$0xff]
        %v1908 = vld [vmem:[%s252 + $0x1c0] sm:$0xff]
        %v1909 = vld [vmem:[%s252 + $0x1c8] sm:$0xff]
        %v1910 = vld [vmem:[%s252 + $0x1d0] sm:$0xff]
        %v1911 = vld [vmem:[%s252 + $0x1d8] sm:$0xff]
        %v1912 = vld [vmem:[%s252 + $0x1e0] sm:$0xff]
        %v1913 = vld [vmem:[%s252 + $0x1e8] sm:$0xff]
        %v1914 = vld [vmem:[%s252 + $0x1f0] sm:$0xff]
        %v1915 = vld [vmem:[%s252 + $0x1f8] sm:$0xff]
        %1916 = vmatprep.subr.mxu0 0.0
        %1917 = vmatpush1.msra.mxu0 %v1867
        %1918 = vmatprep.subr.mxu0 0.0
        %1919 = vmatpush1.msra.mxu0 %v1866
        %1920 = vmatprep.subr.mxu0 0.0
        %1921 = vmatpush1.msra.mxu0 %v1865
        %1922 = vmatprep.subr.mxu0 0.0
        %1923 = vmatpush1.msra.mxu0 %v1864
        %1924 = vmatprep.subr.mxu0 0.0
        %1925 = vmatpush1.msra.mxu0 %v1863
        %1926 = vmatprep.subr.mxu0 0.0
        %1927 = vmatpush1.msra.mxu0 %v1862
        %1928 = vmatprep.subr.mxu0 0.0
        %1929 = vmatpush1.msra.mxu0 %v1861
        %1930 = vmatprep.subr.mxu0 0.0
        %1931 = vmatpush1.msra.mxu0 %v1860
        %1932 = vmatprep.subr.mxu0 0.0
        %1933 = vmatpush1.msra.mxu0 %v1859
        %1934 = vmatprep.subr.mxu0 0.0
        %1935 = vmatpush1.msra.mxu0 %v1858
        %1936 = vmatprep.subr.mxu0 0.0
        %1937 = vmatpush1.msra.mxu0 %v1857
        %1938 = vmatprep.subr.mxu0 0.0
        %1939 = vmatpush1.msra.mxu0 %v1856
        %1940 = vmatprep.subr.mxu0 0.0
        %1941 = vmatpush1.msra.mxu0 %v1855
        %1942 = vmatprep.subr.mxu0 0.0
        %1943 = vmatpush1.msra.mxu0 %v1854
        %1944 = vmatprep.subr.mxu0 0.0
        %1945 = vmatpush1.msra.mxu0 %v1853
        %1946 = vmatprep.subr.mxu0 0.0
        %1947 = vmatpush1.msra.mxu0 %v1852
        %1948 = vmatprep.subr.mxu0 0.0
        %1949 = vmatpush2.msra.mxu0 %v1883
        %1950 = vmatprep.subr.mxu0 0.0
        %1951 = vmatpush2.msra.mxu0 %v1882
        %1952 = vmatprep.subr.mxu0 0.0
        %1953 = vmatpush2.msra.mxu0 %v1881
        %1954 = vmatprep.subr.mxu0 0.0
        %1955 = vmatpush2.msra.mxu0 %v1880
        %1956 = vmatprep.subr.mxu0 0.0
        %1957 = vmatpush2.msra.mxu0 %v1879
        %1958 = vmatprep.subr.mxu0 0.0
        %1959 = vmatpush2.msra.mxu0 %v1878
        %1960 = vmatprep.subr.mxu0 0.0
        %1961 = vmatpush2.msra.mxu0 %v1877
        %1962 = vmatprep.subr.mxu0 0.0
        %1963 = vmatpush2.msra.mxu0 %v1876
        %1964 = vmatprep.subr.mxu0 0.0
        %1965 = vmatpush2.msra.mxu0 %v1875
        %1966 = vmatprep.subr.mxu0 0.0
        %1967 = vmatpush2.msra.mxu0 %v1874
        %1968 = vmatprep.subr.mxu0 0.0
        %1969 = vmatpush2.msra.mxu0 %v1873
        %1970 = vmatprep.subr.mxu0 0.0
        %1971 = vmatpush2.msra.mxu0 %v1872
        %1972 = vmatprep.subr.mxu0 0.0
        %1973 = vmatpush2.msra.mxu0 %v1871
        %1974 = vmatprep.subr.mxu0 0.0
        %1975 = vmatpush2.msra.mxu0 %v1870
        %1976 = vmatprep.subr.mxu0 0.0
        %1977 = vmatpush2.msra.mxu0 %v1869
        %1978 = vmatprep.subr.mxu0 0.0
        %1979 = vmatpush2.msra.mxu0 %v1868
        %1980 = vmatprep.mubr.f32.mxu0 %v1778
        %1981 = vmatmul.mubr.f32.gmra.mxu0 %v1776
        %v1982 = vpop.f32.mrf.mxu0
        %v1983 = vadd.f32 0.0, %v1982
        %v1984 = vpop.f32.mrf.mxu0
        %1985 = vdwg.mxu0
        %1986 = vmatprep.subr.mxu0 0.0
        %1987 = vmatpush1.msra.mxu0 %v1899
        %1988 = vmatprep.subr.mxu0 0.0
        %1989 = vmatpush1.msra.mxu0 %v1898
        %1990 = vmatprep.subr.mxu0 0.0
        %1991 = vmatpush1.msra.mxu0 %v1897
        %1992 = vmatprep.subr.mxu0 0.0
        %1993 = vmatpush1.msra.mxu0 %v1896
        %1994 = vmatprep.subr.mxu0 0.0
        %1995 = vmatpush1.msra.mxu0 %v1895
        %1996 = vmatprep.subr.mxu0 0.0
        %1997 = vmatpush1.msra.mxu0 %v1894
        %1998 = vmatprep.subr.mxu0 0.0
        %1999 = vmatpush1.msra.mxu0 %v1893
        %2000 = vmatprep.subr.mxu0 0.0
        %2001 = vmatpush1.msra.mxu0 %v1892
        %2002 = vmatprep.subr.mxu0 0.0
        %2003 = vmatpush1.msra.mxu0 %v1891
        %2004 = vmatprep.subr.mxu0 0.0
        %2005 = vmatpush1.msra.mxu0 %v1890
        %2006 = vmatprep.subr.mxu0 0.0
        %2007 = vmatpush1.msra.mxu0 %v1889
        %2008 = vmatprep.subr.mxu0 0.0
        %2009 = vmatpush1.msra.mxu0 %v1888
        %2010 = vmatprep.subr.mxu0 0.0
        %2011 = vmatpush1.msra.mxu0 %v1887
        %2012 = vmatprep.subr.mxu0 0.0
        %2013 = vmatpush1.msra.mxu0 %v1886
        %2014 = vmatprep.subr.mxu0 0.0
        %2015 = vmatpush1.msra.mxu0 %v1885
        %2016 = vmatprep.subr.mxu0 0.0
        %2017 = vmatpush1.msra.mxu0 %v1884
        %2018 = vmatprep.subr.mxu0 0.0
        %2019 = vmatpush2.msra.mxu0 %v1915
        %2020 = vmatprep.subr.mxu0 0.0
        %2021 = vmatpush2.msra.mxu0 %v1914
        %2022 = vmatprep.subr.mxu0 0.0
        %2023 = vmatpush2.msra.mxu0 %v1913
        %2024 = vmatprep.subr.mxu0 0.0
        %2025 = vmatpush2.msra.mxu0 %v1912
        %2026 = vmatprep.subr.mxu0 0.0
        %2027 = vmatpush2.msra.mxu0 %v1911
        %2028 = vmatprep.subr.mxu0 0.0
        %2029 = vmatpush2.msra.mxu0 %v1910
        %2030 = vmatprep.subr.mxu0 0.0
        %2031 = vmatpush2.msra.mxu0 %v1909
        %2032 = vmatprep.subr.mxu0 0.0
        %2033 = vmatpush2.msra.mxu0 %v1908
        %2034 = vmatprep.subr.mxu0 0.0
        %2035 = vmatpush2.msra.mxu0 %v1907
        %2036 = vmatprep.subr.mxu0 0.0
        %2037 = vmatpush2.msra.mxu0 %v1906
        %2038 = vmatprep.subr.mxu0 0.0
        %2039 = vmatpush2.msra.mxu0 %v1905
        %2040 = vmatprep.subr.mxu0 0.0
        %2041 = vmatpush2.msra.mxu0 %v1904
        %2042 = vmatprep.subr.mxu0 0.0
        %2043 = vmatpush2.msra.mxu0 %v1903
        %2044 = vmatprep.subr.mxu0 0.0
        %2045 = vmatpush2.msra.mxu0 %v1902
        %2046 = vmatprep.subr.mxu0 0.0
        %2047 = vmatpush2.msra.mxu0 %v1901
        %2048 = vmatprep.subr.mxu0 0.0
        %2049 = vmatpush2.msra.mxu0 %v1900
        %2050 = vmatprep.mubr.f32.mxu0 %v1849
        %2051 = vmatmul.mubr.f32.gmra.mxu0 %v1847
        %v2052 = vpop.f32.mrf.mxu0
        %v2053 = vadd.f32 %v1983, %v2052
        %v2054 = vpop.f32.mrf.mxu0
        %2055 = vdwg.mxu0
        %v2056 = vadd.f32 %v1851, %v2053
        %2057 = vst [vmem:[#allocation2] sm:$0x3] %v2056
        %p2058 = scmp.eq.s32.totalorder %s23, 3
        // Predicated region
        $region57: #{cnn_model_forward.1} parent=39 // pred_check
          %p2059 = pneg %p2058
        $region58: #{cnn_model_forward.1} parent=39 // pred_check_branch
          %2061 = sbr.rel (%p2059) target = $region60
        $region59: #{cnn_model_forward.1} parent=39 // pred_region
          %v2062 = vld [vmem:[#allocation8] sm:$0x1]
          %v2063 = vld [vmem:[#allocation8 + $0x1] sm:$0x1]
          %v2064 = vld [vmem:[#allocation8 + $0x2] sm:$0x1]
          %v2065 = vld [vmem:[#allocation2] sm:$0x3]
          %v2066 = vlaneseq
          %v2067 = vshrl.u32 %v2066, 7
          %v2068 = vsub.s32 0, %v2067
          %v2069 = vrot.slane %v2062, %v2068
          %v2070 = vadd.f32 %v2065, %v2069
          %vm2071 = vcmask 1041408
          %v2072 = vsel %vm2071, %v2070, 0.0
          %v2073 = vrot.slane %v2072, 4
          %v2074 = vadd.f32 %v2072, %v2073
          %v2075 = vrot.slane %v2074, 2
          %v2076 = vadd.f32 %v2074, %v2075
          %v2077 = vrot.slane %v2076, 1
          %v2078 = vadd.f32 %v2076, %v2077
          %v2079 = vrcp.pop 2.0
          %v2080 = vmul.f32 %v2078, %v2079
          %v2081 = vsub.f32 %v2070, %v2080
          %v2082 = vmul.f32 %v2081, %v2081
          %v2083 = vsel %vm2071, %v2082, 0.0
          %v2084 = vrot.slane %v2083, 4
          %v2085 = vadd.f32 %v2083, %v2084
          %v2086 = vrot.slane %v2085, 2
          %v2087 = vadd.f32 %v2085, %v2086
          %v2088 = vrot.slane %v2087, 1
          %v2089 = vadd.f32 %v2087, %v2088
          %v2090 = vmul.f32 %v2089, %v2079
          %v2091 = vlaneseq
          %v2092 = vshrl.u32 %v2091, 7
          %v2093 = vsub.s32 0, %v2092
          %v2094 = vrot.slane %v2063, %v2093
          %v2095 = vmul.f32 %v2094, %v2081
          %v2096 = vadd.f32 %v2090, 1e-05
          %v2097 = vrsqrt.pop %v2096
          %v2098 = vmul.f32 %v2095, %v2097
          %v2099 = vlaneseq
          %v2100 = vshrl.u32 %v2099, 7
          %v2101 = vsub.s32 0, %v2100
          %v2102 = vrot.slane %v2064, %v2101
          %v2103 = vadd.f32 %v2098, %v2102
          %2104 = vst [vmem:[#allocation9] sm:$0x3] %v2103
        $region60: #{cnn_model_forward.1} parent=39 // pred_fallthru
          _
        // Predicated region
        $region61: #{cnn_model_forward.1} parent=39 // pred_check
          %p2105 = pneg %p151
        $region62: #{cnn_model_forward.1} parent=39 // pred_check_branch
          %2107 = sbr.rel (%p2105) target = $region64
        $region63: #{cnn_model_forward.1} parent=39 // pred_region
          %s2109 = ssub.s32 32, 32
          %2110 = vsyncadd [#allocation5], %s2109
          %s2112 = sshll.u32 [#allocation9], 4
          %s2113 = int_to_ptr.vmem [resolvable:$true] %s2112
          %2115 = dma.vmem_to_hbm [thread:$0]  %s2113, 32, %s5, [#allocation5]
        $region64: #{cnn_model_forward.1} parent=39 // pred_fallthru
          _
        // Predicated region
        $region65: #{cnn_model_forward.1} parent=39 // pred_check
          %p2116 = pneg %p151
        $region66: #{cnn_model_forward.1} parent=39 // pred_check_branch
          %2118 = sbr.rel (%p2116) target = $region68
        $region67: #{cnn_model_forward.1} parent=39 // pred_region
          %2119 = dma.done [#allocation5], 32
        $region68: #{cnn_model_forward.1} parent=39 // pred_fallthru
          _
      $region40: #{cnn_model_forward.1} parent=5 // pred_fallthru
        _
      %p2120 = scmp.le.s32.totalorder 2, %s18
      // Predicated region
      $region69: #{cnn_model_forward.1} parent=5 // pred_check
        %p2121 = pneg %p2120
      $region70: #{cnn_model_forward.1} parent=5 // pred_check_branch
        %2123 = sbr.rel (%p2121) target = $region72
      $region71: #{cnn_model_forward.1} parent=5 // pred_region
        %s2124 = ssub.s32 %s18, 2
      $region72: #{cnn_model_forward.1} parent=5 // pred_fallthru
        _
    $region6: #{cnn_model_forward.1} parent=1 // loop_footer
      %s22 = sadd.s32 1, %s18
    $region7: #{cnn_model_forward.1} parent=1 // loop_footer_branch
      %17 = sbr.rel target = $region3
    $region8: #{cnn_model_forward.1} parent=1 // loop_exit
      _
    %2125 = vsyncpa [#allocation4], 1
    %s2126 = scalar_lea.sflag [#allocation4], 1
    %2127 = vsyncpa %s2126, 1
    %2128 = vsyncpa [#allocation7], 1
    %s2129 = scalar_lea.sflag [#allocation7], 1
    %2130 = vsyncpa %s2129, 1
    %2131 = vsyncpa [#allocation5], 1
    %s2132 = scalar_lea.sflag [#allocation5], 1
    %2133 = vsyncpa %s2132, 1

</llo_original>
